<compile_context>
chip_gen: v6e
topology: v6e:2x2x1
jax: 0.10.0
libtpu: 0.0.40
codegen_flags: <defaults>
</compile_context>

<pallas_src>
import functools

import jax
import jax.numpy as jnp
from jax.experimental import pallas as pl
from jax.experimental.pallas import tpu as pltpu

# ---- constants (stand-ins for the original `constants` module) -------------
NUM_CONV_LAYERS = 4
INTERMEDIATE_CHANNEL_DIM = 32
WAV_CHUNK_SIZE = 64
ENCODED_BITSEQ_LENGTH = 16
IN_CHANNELS = 256  # hard-coded in the PyTorch module


def block_dilations():
    return tuple(2 ** i for i in range(NUM_CONV_LAYERS))


# ---- fused Pallas kernel ----------------------------------------------------
def _fused_encoder_kernel(*refs, dilations):
    """Whole ConvEncoder forward in a single invocation (no grid).

    refs (inputs, then output), all f32, M = B * T:
      x_ref                        (M, 256)   channels-last, batch folded into rows
      [w1_i, w0_i, b_i] x (L-1)    conv layers 0..L-2, weights pre-transposed (Cin, Cout)
      w1_last, w0_last             (1, C)     Cout=1 last conv taps, as rows
      masks_ref                    (M, L)     1.0 where (row % T) >= dilation_i else 0.0
      wl_ref                       (M, ENC)   linear weight (transposed, tiled over batch)
      seg_ref                      (B, M)     segment-sum matrix: 1.0 where row // T == b
      beff_ref                     (1, ENC)   fused bias (linear bias + last-conv bias term)
      out_ref                      (B, ENC)
    """
    n_layers = len(dilations)
    it = iter(refs)
    x_ref = next(it)
    conv_params = [(next(it), next(it), next(it)) for _ in range(n_layers - 1)]
    w1_last_ref = next(it)
    w0_last_ref = next(it)
    masks_ref = next(it)
    wl_ref = next(it)
    seg_ref = next(it)
    beff_ref = next(it)
    out_ref = next(it)

    masks = masks_ref[...]  # (M, L)
    x = x_ref[...]          # (M, Cin)

    def shifted(v, layer_idx):
        # v[r - d] within each length-T segment; zero where (r % T) < d.
        # The mask also kills pltpu.roll's wrap-around rows (r < d is a subset
        # of r % T < d), and blocks cross-batch leakage at segment boundaries.
        d = dilations[layer_idx]
        m = masks[:, layer_idx:layer_idx + 1]            # (M, 1)
        return pltpu.roll(v, shift=d, axis=0) * m

    # conv layers 0 .. L-2: y = x @ W[:,:,1].T + x_shift @ W[:,:,0].T + b
    for i, (w1_ref, w0_ref, b_ref) in enumerate(conv_params):
        x_prev = shifted(x, i)
        y = jnp.dot(x, w1_ref[...], preferred_element_type=jnp.float32)
        y = y + jnp.dot(x_prev, w0_ref[...], preferred_element_type=jnp.float32)
        x = y + b_ref[...]                               # (M, 32)

    # last conv (Cout = 1) fused with Linear(T -> ENC):
    #   z[r]      = sum_c x[r,c]*w1_last[c] + x_prev[r,c]*w0_last[c]   (no bias)
    #   out[b,k]  = sum_r seg[b,r] * z[r] * wl[r,k] + b_eff[k]
    last = n_layers - 1
    x_prev = shifted(x, last)
    g = x * w1_last_ref[...] + x_prev * w0_last_ref[...]  # (M, 32)  VPU
    z = jnp.sum(g, axis=-1, keepdims=True)                # (M, 1)   lane reduce
    p = z * wl_ref[...]                                   # (M, ENC)
    out = jnp.dot(seg_ref[...], p, preferred_element_type=jnp.float32)  # (B, ENC)
    out_ref[...] = (out + beff_ref[...]).astype(out_ref.dtype)


# ---- one-time parameter preprocessing (hoisted out of the forward) ----------
def prepare_params(params, batch_size):
    """Torch-layout params -> kernel-layout arrays (weights pre-transposed,
    last conv folded into the linear, masks / segment matrix precomputed)."""
    dils = block_dilations()
    T = WAV_CHUNK_SIZE
    M = batch_size * T

    arrays = []
    for (w, b) in params["convs"][:-1]:                  # layers 0 .. L-2
        cout = w.shape[0]
        arrays.append(jnp.transpose(w[:, :, 1]))         # (Cin, Cout): tap at t
        arrays.append(jnp.transpose(w[:, :, 0]))         # (Cin, Cout): tap at t - d
        arrays.append(b.reshape(1, cout))                # (1, Cout)

    w_last, b_last = params["convs"][-1]                 # (1, C, 2), (1,)
    arrays.append(w_last[:, :, 1])                       # (1, C)
    arrays.append(w_last[:, :, 0])                       # (1, C)

    rows = jnp.arange(M, dtype=jnp.int32)
    masks = jnp.stack(
        [((rows % T) >= d).astype(jnp.float32) for d in dils], axis=1)   # (M, L)
    arrays.append(masks)

    w_lin, b_lin = params["linear"]                      # (ENC, T), (ENC,)
    arrays.append(jnp.tile(jnp.transpose(w_lin), (batch_size, 1)))       # (M, ENC)
    arrays.append((rows[None, :] // T ==
                   jnp.arange(batch_size, dtype=jnp.int32)[:, None]
                   ).astype(jnp.float32))                                # (B, M)
    b_eff = b_lin + b_last[0] * jnp.sum(w_lin, axis=1)   # fold last-conv bias
    arrays.append(b_eff.reshape(1, -1))                  # (1, ENC)

    return tuple(arrays)


# ---- forward wrapper ---------------------------------------------------------
def conv_encoder_forward(x_ncw, prep):
    """x_ncw: (B, 256, T) in the PyTorch NCW layout. Returns (B, ENC)."""
    B, C, T = x_ncw.shape
    x2 = jnp.transpose(x_ncw, (0, 2, 1)).reshape(B * T, C)   # NCW -> (B*T, C)
    arrays = (x2,) + tuple(prep)
    in_specs = [pl.BlockSpec(a.shape, lambda: (0, 0)) for a in arrays]
    return pl.pallas_call(
        functools.partial(_fused_encoder_kernel, dilations=block_dilations()),
        out_shape=jax.ShapeDtypeStruct((B, ENCODED_BITSEQ_LENGTH), x_ncw.dtype),
        in_specs=in_specs,
        out_specs=pl.BlockSpec((B, ENCODED_BITSEQ_LENGTH), lambda: (0, 0)),
    )(*arrays)


# ---- deterministic parameter init (torch layout) -----------------------------
def init_params(key):
    dils = block_dilations()
    convs = []
    for i in range(NUM_CONV_LAYERS):
        cin = IN_CHANNELS if i == 0 else INTERMEDIATE_CHANNEL_DIM
        cout = 1 if i == NUM_CONV_LAYERS - 1 else INTERMEDIATE_CHANNEL_DIM
        key, kw, kb = jax.random.split(key, 3)
        bound = 1.0 / jnp.sqrt(cin * 2.0)
        w = jax.random.uniform(kw, (cout, cin, 2), jnp.float32, -bound, bound)
        b = jax.random.uniform(kb, (cout,), jnp.float32, -bound, bound)
        convs.append((w, b))
    key, kw, kb = jax.random.split(key, 3)
    bound = 1.0 / jnp.sqrt(float(WAV_CHUNK_SIZE))
    w_lin = jax.random.uniform(
        kw, (ENCODED_BITSEQ_LENGTH, WAV_CHUNK_SIZE), jnp.float32, -bound, bound)
    b_lin = jax.random.uniform(kb, (ENCODED_BITSEQ_LENGTH,), jnp.float32, -bound, bound)
    return {"convs": convs, "dilations": list(dils), "linear": (w_lin, b_lin)}


# ---- pure-JAX reference (same math, no Pallas) -------------------------------
def reference_forward(x_ncw, params):
    x = jnp.transpose(x_ncw, (0, 2, 1))  # (B, T, C)
    for (w, b), d in zip(params["convs"], params["dilations"]):
        w0 = jnp.transpose(w[:, :, 0])
        w1 = jnp.transpose(w[:, :, 1])
        x_prev = jnp.pad(x, ((0, 0), (d, 0), (0, 0)))[:, : x.shape[1], :]
        x = x @ w1 + x_prev @ w0 + b[None, None, :]
    x = x[:, :, 0]
    w_lin, b_lin = params["linear"]
    return x @ jnp.transpose(w_lin) + b_lin[None, :]


if __name__ == "__main__":
    key = jax.random.PRNGKey(0)
    key, kx = jax.random.split(key)
    B = 2
    x = jax.random.normal(kx, (B, IN_CHANNELS, WAV_CHUNK_SIZE), jnp.float32)
    params = init_params(key)
    prep = prepare_params(params, B)

    fwd = jax.jit(conv_encoder_forward)
    out = jax.block_until_ready(fwd(x, prep))

    ref = reference_forward(x, params)
    assert out.shape == (B, ENCODED_BITSEQ_LENGTH), out.shape
    assert jnp.allclose(out, ref, atol=1e-4, rtol=1e-4), "mismatch vs reference"

    print("KERNEL_OK")
</pallas_src>

<mosaic_0001>
module attributes {stable_mosaic.version = 11 : i64} {
  func.func @_fused_encoder_kernel(%arg0: memref<128x256xf32, #tpu.memory_space<vmem>>, %arg1: memref<256x32xf32, #tpu.memory_space<vmem>>, %arg2: memref<256x32xf32, #tpu.memory_space<vmem>>, %arg3: memref<1x32xf32, #tpu.memory_space<vmem>>, %arg4: memref<32x32xf32, #tpu.memory_space<vmem>>, %arg5: memref<32x32xf32, #tpu.memory_space<vmem>>, %arg6: memref<1x32xf32, #tpu.memory_space<vmem>>, %arg7: memref<32x32xf32, #tpu.memory_space<vmem>>, %arg8: memref<32x32xf32, #tpu.memory_space<vmem>>, %arg9: memref<1x32xf32, #tpu.memory_space<vmem>>, %arg10: memref<1x32xf32, #tpu.memory_space<vmem>>, %arg11: memref<1x32xf32, #tpu.memory_space<vmem>>, %arg12: memref<128x4xf32, #tpu.memory_space<vmem>>, %arg13: memref<128x16xf32, #tpu.memory_space<vmem>>, %arg14: memref<2x128xf32, #tpu.memory_space<vmem>>, %arg15: memref<1x16xf32, #tpu.memory_space<vmem>>, %arg16: memref<2x16xf32, #tpu.memory_space<vmem>>) attributes {dimension_semantics = [], scalar_prefetch = 0 : i64, scratch_operands = 0 : i64, tpu.core_type = #tpu.core_type<tc>} {
    %c0 = arith.constant 0 : index
    %c0_0 = arith.constant 0 : index
    %0 = vector.load %arg12[%c0, %c0_0] : memref<128x4xf32, #tpu.memory_space<vmem>>, vector<128x4xf32>
    %c0_1 = arith.constant 0 : index
    %c0_2 = arith.constant 0 : index
    %1 = vector.load %arg0[%c0_1, %c0_2] : memref<128x256xf32, #tpu.memory_space<vmem>>, vector<128x256xf32>
    %2 = vector.extract_strided_slice %0 {offsets = [0, 0], sizes = [128, 1], strides = [1, 1]} : vector<128x4xf32> to vector<128x1xf32>
    %c1_i32 = arith.constant 1 : i32
    %3 = tpu.dynamic_rotate %1 by %c1_i32 dim 0 : vector<128x256xf32>, i32 -> vector<128x256xf32>
    %4 = vector.broadcast %2 : vector<128x1xf32> to vector<128x256xf32>
    %5 = arith.mulf %3, %4 : vector<128x256xf32>
    %c0_3 = arith.constant 0 : index
    %c0_4 = arith.constant 0 : index
    %6 = vector.load %arg1[%c0_3, %c0_4] : memref<256x32xf32, #tpu.memory_space<vmem>>, vector<256x32xf32>
    %cst = arith.constant dense<0.000000e+00> : vector<128x32xf32>
    %7 = tpu.matmul %1, %6, %cst {dimension_numbers = #tpu.dot_dimension_numbers<[1], [0], [0], [1], [0, 0, 1, 1], [], []>} : vector<128x256xf32>, vector<256x32xf32>, vector<128x32xf32> -> vector<128x32xf32>
    %c0_5 = arith.constant 0 : index
    %c0_6 = arith.constant 0 : index
    %8 = vector.load %arg2[%c0_5, %c0_6] : memref<256x32xf32, #tpu.memory_space<vmem>>, vector<256x32xf32>
    %cst_7 = arith.constant dense<0.000000e+00> : vector<128x32xf32>
    %9 = tpu.matmul %5, %8, %cst_7 {dimension_numbers = #tpu.dot_dimension_numbers<[1], [0], [0], [1], [0, 0, 1, 1], [], []>} : vector<128x256xf32>, vector<256x32xf32>, vector<128x32xf32> -> vector<128x32xf32>
    %10 = arith.addf %7, %9 : vector<128x32xf32>
    %c0_8 = arith.constant 0 : index
    %c0_9 = arith.constant 0 : index
    %11 = vector.load %arg3[%c0_8, %c0_9] : memref<1x32xf32, #tpu.memory_space<vmem>>, vector<1x32xf32>
    %12 = vector.broadcast %11 : vector<1x32xf32> to vector<128x32xf32>
    %13 = arith.addf %10, %12 : vector<128x32xf32>
    %14 = vector.extract_strided_slice %0 {offsets = [0, 1], sizes = [128, 1], strides = [1, 1]} : vector<128x4xf32> to vector<128x1xf32>
    %c2_i32 = arith.constant 2 : i32
    %15 = tpu.dynamic_rotate %13 by %c2_i32 dim 0 : vector<128x32xf32>, i32 -> vector<128x32xf32>
    %16 = vector.broadcast %14 : vector<128x1xf32> to vector<128x32xf32>
    %17 = arith.mulf %15, %16 : vector<128x32xf32>
    %c0_10 = arith.constant 0 : index
    %c0_11 = arith.constant 0 : index
    %18 = vector.load %arg4[%c0_10, %c0_11] : memref<32x32xf32, #tpu.memory_space<vmem>>, vector<32x32xf32>
    %cst_12 = arith.constant dense<0.000000e+00> : vector<128x32xf32>
    %19 = tpu.matmul %13, %18, %cst_12 {dimension_numbers = #tpu.dot_dimension_numbers<[1], [0], [0], [1], [0, 0, 1, 1], [], []>} : vector<128x32xf32>, vector<32x32xf32>, vector<128x32xf32> -> vector<128x32xf32>
    %c0_13 = arith.constant 0 : index
    %c0_14 = arith.constant 0 : index
    %20 = vector.load %arg5[%c0_13, %c0_14] : memref<32x32xf32, #tpu.memory_space<vmem>>, vector<32x32xf32>
    %cst_15 = arith.constant dense<0.000000e+00> : vector<128x32xf32>
    %21 = tpu.matmul %17, %20, %cst_15 {dimension_numbers = #tpu.dot_dimension_numbers<[1], [0], [0], [1], [0, 0, 1, 1], [], []>} : vector<128x32xf32>, vector<32x32xf32>, vector<128x32xf32> -> vector<128x32xf32>
    %22 = arith.addf %19, %21 : vector<128x32xf32>
    %c0_16 = arith.constant 0 : index
    %c0_17 = arith.constant 0 : index
    %23 = vector.load %arg6[%c0_16, %c0_17] : memref<1x32xf32, #tpu.memory_space<vmem>>, vector<1x32xf32>
    %24 = vector.broadcast %23 : vector<1x32xf32> to vector<128x32xf32>
    %25 = arith.addf %22, %24 : vector<128x32xf32>
    %26 = vector.extract_strided_slice %0 {offsets = [0, 2], sizes = [128, 1], strides = [1, 1]} : vector<128x4xf32> to vector<128x1xf32>
    %c4_i32 = arith.constant 4 : i32
    %27 = tpu.dynamic_rotate %25 by %c4_i32 dim 0 : vector<128x32xf32>, i32 -> vector<128x32xf32>
    %28 = vector.broadcast %26 : vector<128x1xf32> to vector<128x32xf32>
    %29 = arith.mulf %27, %28 : vector<128x32xf32>
    %c0_18 = arith.constant 0 : index
    %c0_19 = arith.constant 0 : index
    %30 = vector.load %arg7[%c0_18, %c0_19] : memref<32x32xf32, #tpu.memory_space<vmem>>, vector<32x32xf32>
    %cst_20 = arith.constant dense<0.000000e+00> : vector<128x32xf32>
    %31 = tpu.matmul %25, %30, %cst_20 {dimension_numbers = #tpu.dot_dimension_numbers<[1], [0], [0], [1], [0, 0, 1, 1], [], []>} : vector<128x32xf32>, vector<32x32xf32>, vector<128x32xf32> -> vector<128x32xf32>
    %c0_21 = arith.constant 0 : index
    %c0_22 = arith.constant 0 : index
    %32 = vector.load %arg8[%c0_21, %c0_22] : memref<32x32xf32, #tpu.memory_space<vmem>>, vector<32x32xf32>
    %cst_23 = arith.constant dense<0.000000e+00> : vector<128x32xf32>
    %33 = tpu.matmul %29, %32, %cst_23 {dimension_numbers = #tpu.dot_dimension_numbers<[1], [0], [0], [1], [0, 0, 1, 1], [], []>} : vector<128x32xf32>, vector<32x32xf32>, vector<128x32xf32> -> vector<128x32xf32>
    %34 = arith.addf %31, %33 : vector<128x32xf32>
    %c0_24 = arith.constant 0 : index
    %c0_25 = arith.constant 0 : index
    %35 = vector.load %arg9[%c0_24, %c0_25] : memref<1x32xf32, #tpu.memory_space<vmem>>, vector<1x32xf32>
    %36 = vector.broadcast %35 : vector<1x32xf32> to vector<128x32xf32>
    %37 = arith.addf %34, %36 : vector<128x32xf32>
    %38 = vector.extract_strided_slice %0 {offsets = [0, 3], sizes = [128, 1], strides = [1, 1]} : vector<128x4xf32> to vector<128x1xf32>
    %c8_i32 = arith.constant 8 : i32
    %39 = tpu.dynamic_rotate %37 by %c8_i32 dim 0 : vector<128x32xf32>, i32 -> vector<128x32xf32>
    %40 = vector.broadcast %38 : vector<128x1xf32> to vector<128x32xf32>
    %41 = arith.mulf %39, %40 : vector<128x32xf32>
    %c0_26 = arith.constant 0 : index
    %c0_27 = arith.constant 0 : index
    %42 = vector.load %arg10[%c0_26, %c0_27] : memref<1x32xf32, #tpu.memory_space<vmem>>, vector<1x32xf32>
    %43 = vector.broadcast %42 : vector<1x32xf32> to vector<128x32xf32>
    %44 = arith.mulf %37, %43 : vector<128x32xf32>
    %c0_28 = arith.constant 0 : index
    %c0_29 = arith.constant 0 : index
    %45 = vector.load %arg11[%c0_28, %c0_29] : memref<1x32xf32, #tpu.memory_space<vmem>>, vector<1x32xf32>
    %46 = vector.broadcast %45 : vector<1x32xf32> to vector<128x32xf32>
    %47 = arith.mulf %41, %46 : vector<128x32xf32>
    %48 = arith.addf %44, %47 : vector<128x32xf32>
    %cst_30 = arith.constant dense<0.000000e+00> : vector<128xf32>
    %49 = vector.multi_reduction <add>, %48, %cst_30 [1] : vector<128x32xf32> to vector<128xf32>
    %50 = vector.shape_cast %49 : vector<128xf32> to vector<128x1xf32>
    %c0_31 = arith.constant 0 : index
    %c0_32 = arith.constant 0 : index
    %51 = vector.load %arg13[%c0_31, %c0_32] : memref<128x16xf32, #tpu.memory_space<vmem>>, vector<128x16xf32>
    %52 = vector.broadcast %50 : vector<128x1xf32> to vector<128x16xf32>
    %53 = arith.mulf %52, %51 : vector<128x16xf32>
    %c0_33 = arith.constant 0 : index
    %c0_34 = arith.constant 0 : index
    %54 = vector.load %arg14[%c0_33, %c0_34] : memref<2x128xf32, #tpu.memory_space<vmem>>, vector<2x128xf32>
    %cst_35 = arith.constant dense<0.000000e+00> : vector<2x16xf32>
    %55 = tpu.matmul %54, %53, %cst_35 {dimension_numbers = #tpu.dot_dimension_numbers<[1], [0], [0], [1], [0, 0, 1, 1], [], []>} : vector<2x128xf32>, vector<128x16xf32>, vector<2x16xf32> -> vector<2x16xf32>
    %c0_36 = arith.constant 0 : index
    %c0_37 = arith.constant 0 : index
    %56 = vector.load %arg15[%c0_36, %c0_37] : memref<1x16xf32, #tpu.memory_space<vmem>>, vector<1x16xf32>
    %57 = vector.broadcast %56 : vector<1x16xf32> to vector<2x16xf32>
    %58 = arith.addf %55, %57 : vector<2x16xf32>
    %c0_38 = arith.constant 0 : index
    %c0_39 = arith.constant 0 : index
    %59 = vector.load %arg16[%c0_38, %c0_39] : memref<2x16xf32, #tpu.memory_space<vmem>>, vector<2x16xf32>
    tpu.vector_store %arg16[%c0_38, %c0_39], %58 {strides = array<i32>} : memref<2x16xf32, #tpu.memory_space<vmem>>, vector<2x16xf32>,
    return
  }
}

</mosaic_0001>

<llo_original>
// kernel: conv_encoder_forward.1
$region0: #{conv_encoder_forward.1}
  #allocation0 [shape = 'u32[]', space=smem, size = 0x4, offset = 0x4, fixed_abs, tag = 'smem constant byte address 0x4 - core index']
  #allocation1 [shape = 'u32[144,128]{1,0:T(1,128)}', space=vmem, size = 0x12000, scoped, tag = 'internal scratch']
  %s0 = inlined_call_operand.vmem [shape: f32[128,256], index: 0, kind: input, shape index: {}]
  %s1 = inlined_call_operand.vmem [shape: f32[256,32], index: 1, kind: input, shape index: {}]
  %s2 = inlined_call_operand.vmem [shape: f32[256,32], index: 2, kind: input, shape index: {}]
  %s3 = inlined_call_operand.vmem [shape: f32[1,32], index: 3, kind: input, shape index: {}]
  %s4 = inlined_call_operand.vmem [shape: f32[32,32], index: 4, kind: input, shape index: {}]
  %s5 = inlined_call_operand.vmem [shape: f32[32,32], index: 5, kind: input, shape index: {}]
  %s6 = inlined_call_operand.vmem [shape: f32[1,32], index: 6, kind: input, shape index: {}]
  %s7 = inlined_call_operand.vmem [shape: f32[32,32], index: 7, kind: input, shape index: {}]
  %s8 = inlined_call_operand.vmem [shape: f32[32,32], index: 8, kind: input, shape index: {}]
  %s9 = inlined_call_operand.vmem [shape: f32[1,32], index: 9, kind: input, shape index: {}]
  %s10 = inlined_call_operand.vmem [shape: f32[1,32], index: 10, kind: input, shape index: {}]
  %s11 = inlined_call_operand.vmem [shape: f32[1,32], index: 11, kind: input, shape index: {}]
  %s12 = inlined_call_operand.vmem [shape: f32[128,4], index: 12, kind: input, shape index: {}]
  %s13 = inlined_call_operand.vmem [shape: f32[128,16], index: 13, kind: input, shape index: {}]
  %s14 = inlined_call_operand.vmem [shape: f32[2,128], index: 14, kind: input, shape index: {}]
  %s15 = inlined_call_operand.vmem [shape: f32[1,16], index: 15, kind: input, shape index: {}]
  %s16 = inlined_call_operand.hbm [shape: f32[2,16], index: 16, kind: output, shape index: {}]
  %s17 = sld [smem:[#allocation0]]
  $region74: #{conv_encoder_forward.1} parent=0
    _
  %s19 = ssub.s32 1, %s17
  %s20 = scalar_select 0, %s19, %s17
  $region1: #{conv_encoder_forward.1} parent=0
    #allocation2 [shape = 'u8[1024]{0}', space=vmem, size = 0x400, scoped, tag = 'output window, operand 0, single buffered']
    #allocation3 [shape = 's32[1]{0}', space=sflag, size = 0x4, scoped, tag = 'scoped memory for conv_encoder_forward.1']
    %21 = vsyncpa [#allocation3], 0
    // Predicated region
    $region2: #{conv_encoder_forward.1} parent=1 // pred_check
      _
    $region3: #{conv_encoder_forward.1} parent=1 // pred_check_branch
      %23 = sbr.rel (0) target = $region5
    $region4: #{conv_encoder_forward.1} parent=1 // pred_region
      _
    $region5: #{conv_encoder_forward.1} parent=1 // pred_fallthru
      _
    // Predicated region
    $region6: #{conv_encoder_forward.1} parent=1 // pred_check
      _
    $region7: #{conv_encoder_forward.1} parent=1 // pred_check_branch
      %25 = sbr.rel (0) target = $region9
    $region8: #{conv_encoder_forward.1} parent=1 // pred_region
      _
    $region9: #{conv_encoder_forward.1} parent=1 // pred_fallthru
      _
    // Predicated region
    $region10: #{conv_encoder_forward.1} parent=1 // pred_check
      _
    $region11: #{conv_encoder_forward.1} parent=1 // pred_check_branch
      %27 = sbr.rel (0) target = $region13
    $region12: #{conv_encoder_forward.1} parent=1 // pred_region
      _
    $region13: #{conv_encoder_forward.1} parent=1 // pred_fallthru
      _
    // Predicated region
    $region14: #{conv_encoder_forward.1} parent=1 // pred_check
      _
    $region15: #{conv_encoder_forward.1} parent=1 // pred_check_branch
      %29 = sbr.rel (0) target = $region17
    $region16: #{conv_encoder_forward.1} parent=1 // pred_region
      _
    $region17: #{conv_encoder_forward.1} parent=1 // pred_fallthru
      _
    // Predicated region
    $region18: #{conv_encoder_forward.1} parent=1 // pred_check
      _
    $region19: #{conv_encoder_forward.1} parent=1 // pred_check_branch
      %31 = sbr.rel (0) target = $region21
    $region20: #{conv_encoder_forward.1} parent=1 // pred_region
      _
    $region21: #{conv_encoder_forward.1} parent=1 // pred_fallthru
      _
    // Predicated region
    $region22: #{conv_encoder_forward.1} parent=1 // pred_check
      _
    $region23: #{conv_encoder_forward.1} parent=1 // pred_check_branch
      %33 = sbr.rel (0) target = $region25
    $region24: #{conv_encoder_forward.1} parent=1 // pred_region
      _
    $region25: #{conv_encoder_forward.1} parent=1 // pred_fallthru
      _
    // Predicated region
    $region26: #{conv_encoder_forward.1} parent=1 // pred_check
      _
    $region27: #{conv_encoder_forward.1} parent=1 // pred_check_branch
      %35 = sbr.rel (0) target = $region29
    $region28: #{conv_encoder_forward.1} parent=1 // pred_region
      _
    $region29: #{conv_encoder_forward.1} parent=1 // pred_fallthru
      _
    // Predicated region
    $region30: #{conv_encoder_forward.1} parent=1 // pred_check
      _
    $region31: #{conv_encoder_forward.1} parent=1 // pred_check_branch
      %37 = sbr.rel (0) target = $region33
    $region32: #{conv_encoder_forward.1} parent=1 // pred_region
      _
    $region33: #{conv_encoder_forward.1} parent=1 // pred_fallthru
      _
    // Predicated region
    $region34: #{conv_encoder_forward.1} parent=1 // pred_check
      _
    $region35: #{conv_encoder_forward.1} parent=1 // pred_check_branch
      %39 = sbr.rel (0) target = $region37
    $region36: #{conv_encoder_forward.1} parent=1 // pred_region
      _
    $region37: #{conv_encoder_forward.1} parent=1 // pred_fallthru
      _
    // Predicated region
    $region38: #{conv_encoder_forward.1} parent=1 // pred_check
      _
    $region39: #{conv_encoder_forward.1} parent=1 // pred_check_branch
      %41 = sbr.rel (0) target = $region41
    $region40: #{conv_encoder_forward.1} parent=1 // pred_region
      _
    $region41: #{conv_encoder_forward.1} parent=1 // pred_fallthru
      _
    // Predicated region
    $region42: #{conv_encoder_forward.1} parent=1 // pred_check
      _
    $region43: #{conv_encoder_forward.1} parent=1 // pred_check_branch
      %43 = sbr.rel (0) target = $region45
    $region44: #{conv_encoder_forward.1} parent=1 // pred_region
      _
    $region45: #{conv_encoder_forward.1} parent=1 // pred_fallthru
      _
    // Predicated region
    $region46: #{conv_encoder_forward.1} parent=1 // pred_check
      _
    $region47: #{conv_encoder_forward.1} parent=1 // pred_check_branch
      %45 = sbr.rel (0) target = $region49
    $region48: #{conv_encoder_forward.1} parent=1 // pred_region
      _
    $region49: #{conv_encoder_forward.1} parent=1 // pred_fallthru
      _
    // Predicated region
    $region50: #{conv_encoder_forward.1} parent=1 // pred_check
      _
    $region51: #{conv_encoder_forward.1} parent=1 // pred_check_branch
      %47 = sbr.rel (0) target = $region53
    $region52: #{conv_encoder_forward.1} parent=1 // pred_region
      _
    $region53: #{conv_encoder_forward.1} parent=1 // pred_fallthru
      _
    // Predicated region
    $region54: #{conv_encoder_forward.1} parent=1 // pred_check
      _
    $region55: #{conv_encoder_forward.1} parent=1 // pred_check_branch
      %49 = sbr.rel (0) target = $region57
    $region56: #{conv_encoder_forward.1} parent=1 // pred_region
      _
    $region57: #{conv_encoder_forward.1} parent=1 // pred_fallthru
      _
    // Predicated region
    $region58: #{conv_encoder_forward.1} parent=1 // pred_check
      _
    $region59: #{conv_encoder_forward.1} parent=1 // pred_check_branch
      %51 = sbr.rel (0) target = $region61
    $region60: #{conv_encoder_forward.1} parent=1 // pred_region
      _
    $region61: #{conv_encoder_forward.1} parent=1 // pred_fallthru
      _
    // Predicated region
    $region62: #{conv_encoder_forward.1} parent=1 // pred_check
      _
    $region63: #{conv_encoder_forward.1} parent=1 // pred_check_branch
      %53 = sbr.rel (0) target = $region65
    $region64: #{conv_encoder_forward.1} parent=1 // pred_region
      _
    $region65: #{conv_encoder_forward.1} parent=1 // pred_fallthru
      _
    %v54 = vld [vmem:[%s12] sm:$0xff]
    %v55 = vld [vmem:[%s12 + $0x8] sm:$0xff]
    %v56 = vld [vmem:[%s12 + $0x10] sm:$0xff]
    %v57 = vld [vmem:[%s12 + $0x18] sm:$0xff]
    %v58 = vld [vmem:[%s12 + $0x20] sm:$0xff]
    %v59 = vld [vmem:[%s12 + $0x28] sm:$0xff]
    %v60 = vld [vmem:[%s12 + $0x30] sm:$0xff]
    %v61 = vld [vmem:[%s12 + $0x38] sm:$0xff]
    %v62 = vld [vmem:[%s12 + $0x40] sm:$0xff]
    %v63 = vld [vmem:[%s12 + $0x48] sm:$0xff]
    %v64 = vld [vmem:[%s12 + $0x50] sm:$0xff]
    %v65 = vld [vmem:[%s12 + $0x58] sm:$0xff]
    %v66 = vld [vmem:[%s12 + $0x60] sm:$0xff]
    %v67 = vld [vmem:[%s12 + $0x68] sm:$0xff]
    %v68 = vld [vmem:[%s12 + $0x70] sm:$0xff]
    %v69 = vld [vmem:[%s12 + $0x78] sm:$0xff]
    %v70 = vld [vmem:[%s0] sm:$0xff]
    %v71 = vld [vmem:[%s0 + $0x8] sm:$0xff]
    %v72 = vld [vmem:[%s0 + $0x10] sm:$0xff]
    %v73 = vld [vmem:[%s0 + $0x18] sm:$0xff]
    %v74 = vld [vmem:[%s0 + $0x20] sm:$0xff]
    %v75 = vld [vmem:[%s0 + $0x28] sm:$0xff]
    %v76 = vld [vmem:[%s0 + $0x30] sm:$0xff]
    %v77 = vld [vmem:[%s0 + $0x38] sm:$0xff]
    %v78 = vld [vmem:[%s0 + $0x40] sm:$0xff]
    %v79 = vld [vmem:[%s0 + $0x48] sm:$0xff]
    %v80 = vld [vmem:[%s0 + $0x50] sm:$0xff]
    %v81 = vld [vmem:[%s0 + $0x58] sm:$0xff]
    %v82 = vld [vmem:[%s0 + $0x60] sm:$0xff]
    %v83 = vld [vmem:[%s0 + $0x68] sm:$0xff]
    %v84 = vld [vmem:[%s0 + $0x70] sm:$0xff]
    %v85 = vld [vmem:[%s0 + $0x78] sm:$0xff]
    %v86 = vld [vmem:[%s0 + $0x80] sm:$0xff]
    %v87 = vld [vmem:[%s0 + $0x88] sm:$0xff]
    %v88 = vld [vmem:[%s0 + $0x90] sm:$0xff]
    %v89 = vld [vmem:[%s0 + $0x98] sm:$0xff]
    %v90 = vld [vmem:[%s0 + $0xa0] sm:$0xff]
    %v91 = vld [vmem:[%s0 + $0xa8] sm:$0xff]
    %v92 = vld [vmem:[%s0 + $0xb0] sm:$0xff]
    %v93 = vld [vmem:[%s0 + $0xb8] sm:$0xff]
    %v94 = vld [vmem:[%s0 + $0xc0] sm:$0xff]
    %v95 = vld [vmem:[%s0 + $0xc8] sm:$0xff]
    %v96 = vld [vmem:[%s0 + $0xd0] sm:$0xff]
    %v97 = vld [vmem:[%s0 + $0xd8] sm:$0xff]
    %v98 = vld [vmem:[%s0 + $0xe0] sm:$0xff]
    %v99 = vld [vmem:[%s0 + $0xe8] sm:$0xff]
    %v100 = vld [vmem:[%s0 + $0xf0] sm:$0xff]
    %v101 = vld [vmem:[%s0 + $0xf8] sm:$0xff]
    %v102 = vrot.slane %v70, 7
    %v103 = vrot.slane %v71, 7
    %v104 = vrot.slane %v72, 7
    %v105 = vrot.slane %v73, 7
    %v106 = vrot.slane %v74, 7
    %v107 = vrot.slane %v75, 7
    %v108 = vrot.slane %v76, 7
    %v109 = vrot.slane %v77, 7
    %v110 = vrot.slane %v78, 7
    %v111 = vrot.slane %v79, 7
    %v112 = vrot.slane %v80, 7
    %v113 = vrot.slane %v81, 7
    %v114 = vrot.slane %v82, 7
    %v115 = vrot.slane %v83, 7
    %v116 = vrot.slane %v84, 7
    %v117 = vrot.slane %v85, 7
    %v118 = vrot.slane %v86, 7
    %v119 = vrot.slane %v87, 7
    %v120 = vrot.slane %v88, 7
    %v121 = vrot.slane %v89, 7
    %v122 = vrot.slane %v90, 7
    %v123 = vrot.slane %v91, 7
    %v124 = vrot.slane %v92, 7
    %v125 = vrot.slane %v93, 7
    %v126 = vrot.slane %v94, 7
    %v127 = vrot.slane %v95, 7
    %v128 = vrot.slane %v96, 7
    %v129 = vrot.slane %v97, 7
    %v130 = vrot.slane %v98, 7
    %v131 = vrot.slane %v99, 7
    %v132 = vrot.slane %v100, 7
    %v133 = vrot.slane %v101, 7
    %v134 = vlaneseq
    %v135 = vshrl.u32 %v134, 7
    %vm136 = vcmp.lt.s32.totalorder %v135, 1
    %v137 = vsel %vm136, %v130, %v132
    %v138 = vsel %vm136, %v131, %v133
    %v139 = vsel %vm136, %v128, %v130
    %v140 = vsel %vm136, %v129, %v131
    %v141 = vsel %vm136, %v126, %v128
    %v142 = vsel %vm136, %v127, %v129
    %v143 = vsel %vm136, %v124, %v126
    %v144 = vsel %vm136, %v125, %v127
    %v145 = vsel %vm136, %v122, %v124
    %v146 = vsel %vm136, %v123, %v125
    %v147 = vsel %vm136, %v120, %v122
    %v148 = vsel %vm136, %v121, %v123
    %v149 = vsel %vm136, %v118, %v120
    %v150 = vsel %vm136, %v119, %v121
    %v151 = vsel %vm136, %v116, %v118
    %v152 = vsel %vm136, %v117, %v119
    %v153 = vsel %vm136, %v114, %v116
    %v154 = vsel %vm136, %v115, %v117
    %v155 = vsel %vm136, %v112, %v114
    %v156 = vsel %vm136, %v113, %v115
    %v157 = vsel %vm136, %v110, %v112
    %v158 = vsel %vm136, %v111, %v113
    %v159 = vsel %vm136, %v108, %v110
    %v160 = vsel %vm136, %v109, %v111
    %v161 = vsel %vm136, %v106, %v108
    %v162 = vsel %vm136, %v107, %v109
    %v163 = vsel %vm136, %v104, %v106
    %v164 = vsel %vm136, %v105, %v107
    %v165 = vsel %vm136, %v102, %v104
    %v166 = vsel %vm136, %v103, %v105
    %v167 = vsel %vm136, %v132, %v102
    %v168 = vsel %vm136, %v133, %v103
    %170 = vset.pattern.permute.xlu0 0
    %171 = vperm.xlu0 %170, %v54
    %v172 = vpop.permute.xlu0 %171
    %175 = vset.pattern.permute.xlu0 0
    %176 = vperm.xlu0 %175, %v55
    %v177 = vpop.permute.xlu0 %176
    %180 = vset.pattern.permute.xlu0 0
    %181 = vperm.xlu0 %180, %v56
    %v182 = vpop.permute.xlu0 %181
    %185 = vset.pattern.permute.xlu0 0
    %186 = vperm.xlu0 %185, %v57
    %v187 = vpop.permute.xlu0 %186
    %190 = vset.pattern.permute.xlu0 0
    %191 = vperm.xlu0 %190, %v58
    %v192 = vpop.permute.xlu0 %191
    %195 = vset.pattern.permute.xlu0 0
    %196 = vperm.xlu0 %195, %v59
    %v197 = vpop.permute.xlu0 %196
    %200 = vset.pattern.permute.xlu0 0
    %201 = vperm.xlu0 %200, %v60
    %v202 = vpop.permute.xlu0 %201
    %205 = vset.pattern.permute.xlu0 0
    %206 = vperm.xlu0 %205, %v61
    %v207 = vpop.permute.xlu0 %206
    %210 = vset.pattern.permute.xlu0 0
    %211 = vperm.xlu0 %210, %v62
    %v212 = vpop.permute.xlu0 %211
    %215 = vset.pattern.permute.xlu0 0
    %216 = vperm.xlu0 %215, %v63
    %v217 = vpop.permute.xlu0 %216
    %220 = vset.pattern.permute.xlu0 0
    %221 = vperm.xlu0 %220, %v64
    %v222 = vpop.permute.xlu0 %221
    %225 = vset.pattern.permute.xlu0 0
    %226 = vperm.xlu0 %225, %v65
    %v227 = vpop.permute.xlu0 %226
    %230 = vset.pattern.permute.xlu0 0
    %231 = vperm.xlu0 %230, %v66
    %v232 = vpop.permute.xlu0 %231
    %235 = vset.pattern.permute.xlu0 0
    %236 = vperm.xlu0 %235, %v67
    %v237 = vpop.permute.xlu0 %236
    %240 = vset.pattern.permute.xlu0 0
    %241 = vperm.xlu0 %240, %v68
    %v242 = vpop.permute.xlu0 %241
    %245 = vset.pattern.permute.xlu0 0
    %246 = vperm.xlu0 %245, %v69
    %v247 = vpop.permute.xlu0 %246
    %v249 = vmul.f32 %v167, %v172
    %v250 = vmul.f32 %v168, %v172
    %v251 = vmul.f32 %v165, %v177
    %v252 = vmul.f32 %v166, %v177
    %v253 = vmul.f32 %v163, %v182
    %v254 = vmul.f32 %v164, %v182
    %v255 = vmul.f32 %v161, %v187
    %v256 = vmul.f32 %v162, %v187
    %v257 = vmul.f32 %v159, %v192
    %v258 = vmul.f32 %v160, %v192
    %v259 = vmul.f32 %v157, %v197
    %v260 = vmul.f32 %v158, %v197
    %v261 = vmul.f32 %v155, %v202
    %v262 = vmul.f32 %v156, %v202
    %v263 = vmul.f32 %v153, %v207
    %v264 = vmul.f32 %v154, %v207
    %v265 = vmul.f32 %v151, %v212
    %v266 = vmul.f32 %v152, %v212
    %v267 = vmul.f32 %v149, %v217
    %v268 = vmul.f32 %v150, %v217
    %v269 = vmul.f32 %v147, %v222
    %v270 = vmul.f32 %v148, %v222
    %v271 = vmul.f32 %v145, %v227
    %v272 = vmul.f32 %v146, %v227
    %v273 = vmul.f32 %v143, %v232
    %v274 = vmul.f32 %v144, %v232
    %v275 = vmul.f32 %v141, %v237
    %v276 = vmul.f32 %v142, %v237
    %v277 = vmul.f32 %v139, %v242
    %v278 = vmul.f32 %v140, %v242
    %v279 = vmul.f32 %v137, %v247
    %v280 = vmul.f32 %v138, %v247
    %v281 = vld [vmem:[%s1] sm:$0xff]
    %v282 = vld [vmem:[%s1 + $0x8] sm:$0xff]
    %v283 = vld [vmem:[%s1 + $0x10] sm:$0xff]
    %v284 = vld [vmem:[%s1 + $0x18] sm:$0xff]
    %v285 = vld [vmem:[%s1 + $0x20] sm:$0xff]
    %v286 = vld [vmem:[%s1 + $0x28] sm:$0xff]
    %v287 = vld [vmem:[%s1 + $0x30] sm:$0xff]
    %v288 = vld [vmem:[%s1 + $0x38] sm:$0xff]
    %v289 = vld [vmem:[%s1 + $0x40] sm:$0xff]
    %v290 = vld [vmem:[%s1 + $0x48] sm:$0xff]
    %v291 = vld [vmem:[%s1 + $0x50] sm:$0xff]
    %v292 = vld [vmem:[%s1 + $0x58] sm:$0xff]
    %v293 = vld [vmem:[%s1 + $0x60] sm:$0xff]
    %v294 = vld [vmem:[%s1 + $0x68] sm:$0xff]
    %v295 = vld [vmem:[%s1 + $0x70] sm:$0xff]
    %v296 = vld [vmem:[%s1 + $0x78] sm:$0xff]
    %v297 = vld [vmem:[%s1 + $0x80] sm:$0xff]
    %v298 = vld [vmem:[%s1 + $0x88] sm:$0xff]
    %v299 = vld [vmem:[%s1 + $0x90] sm:$0xff]
    %v300 = vld [vmem:[%s1 + $0x98] sm:$0xff]
    %v301 = vld [vmem:[%s1 + $0xa0] sm:$0xff]
    %v302 = vld [vmem:[%s1 + $0xa8] sm:$0xff]
    %v303 = vld [vmem:[%s1 + $0xb0] sm:$0xff]
    %v304 = vld [vmem:[%s1 + $0xb8] sm:$0xff]
    %v305 = vld [vmem:[%s1 + $0xc0] sm:$0xff]
    %v306 = vld [vmem:[%s1 + $0xc8] sm:$0xff]
    %v307 = vld [vmem:[%s1 + $0xd0] sm:$0xff]
    %v308 = vld [vmem:[%s1 + $0xd8] sm:$0xff]
    %v309 = vld [vmem:[%s1 + $0xe0] sm:$0xff]
    %v310 = vld [vmem:[%s1 + $0xe8] sm:$0xff]
    %v311 = vld [vmem:[%s1 + $0xf0] sm:$0xff]
    %v312 = vld [vmem:[%s1 + $0xf8] sm:$0xff]
    %v313 = vld [vmem:[%s2] sm:$0xff]
    %v314 = vld [vmem:[%s2 + $0x8] sm:$0xff]
    %v315 = vld [vmem:[%s2 + $0x10] sm:$0xff]
    %v316 = vld [vmem:[%s2 + $0x18] sm:$0xff]
    %v317 = vld [vmem:[%s2 + $0x20] sm:$0xff]
    %v318 = vld [vmem:[%s2 + $0x28] sm:$0xff]
    %v319 = vld [vmem:[%s2 + $0x30] sm:$0xff]
    %v320 = vld [vmem:[%s2 + $0x38] sm:$0xff]
    %v321 = vld [vmem:[%s2 + $0x40] sm:$0xff]
    %v322 = vld [vmem:[%s2 + $0x48] sm:$0xff]
    %v323 = vld [vmem:[%s2 + $0x50] sm:$0xff]
    %v324 = vld [vmem:[%s2 + $0x58] sm:$0xff]
    %v325 = vld [vmem:[%s2 + $0x60] sm:$0xff]
    %v326 = vld [vmem:[%s2 + $0x68] sm:$0xff]
    %v327 = vld [vmem:[%s2 + $0x70] sm:$0xff]
    %v328 = vld [vmem:[%s2 + $0x78] sm:$0xff]
    %v329 = vld [vmem:[%s2 + $0x80] sm:$0xff]
    %v330 = vld [vmem:[%s2 + $0x88] sm:$0xff]
    %v331 = vld [vmem:[%s2 + $0x90] sm:$0xff]
    %v332 = vld [vmem:[%s2 + $0x98] sm:$0xff]
    %v333 = vld [vmem:[%s2 + $0xa0] sm:$0xff]
    %v334 = vld [vmem:[%s2 + $0xa8] sm:$0xff]
    %v335 = vld [vmem:[%s2 + $0xb0] sm:$0xff]
    %v336 = vld [vmem:[%s2 + $0xb8] sm:$0xff]
    %v337 = vld [vmem:[%s2 + $0xc0] sm:$0xff]
    %v338 = vld [vmem:[%s2 + $0xc8] sm:$0xff]
    %v339 = vld [vmem:[%s2 + $0xd0] sm:$0xff]
    %v340 = vld [vmem:[%s2 + $0xd8] sm:$0xff]
    %v341 = vld [vmem:[%s2 + $0xe0] sm:$0xff]
    %v342 = vld [vmem:[%s2 + $0xe8] sm:$0xff]
    %v343 = vld [vmem:[%s2 + $0xf0] sm:$0xff]
    %v344 = vld [vmem:[%s2 + $0xf8] sm:$0xff]
    %345 = vmatprep.subr.mxu0 0.0
    %346 = vmatpush1.msra.mxu0 %v328
    %347 = vmatprep.subr.mxu0 0.0
    %348 = vmatpush1.msra.mxu0 %v327
    %349 = vmatprep.subr.mxu0 0.0
    %350 = vmatpush1.msra.mxu0 %v326
    %351 = vmatprep.subr.mxu0 0.0
    %352 = vmatpush1.msra.mxu0 %v325
    %353 = vmatprep.subr.mxu0 0.0
    %354 = vmatpush1.msra.mxu0 %v324
    %355 = vmatprep.subr.mxu0 0.0
    %356 = vmatpush1.msra.mxu0 %v323
    %357 = vmatprep.subr.mxu0 0.0
    %358 = vmatpush1.msra.mxu0 %v322
    %359 = vmatprep.subr.mxu0 0.0
    %360 = vmatpush1.msra.mxu0 %v321
    %361 = vmatprep.subr.mxu0 0.0
    %362 = vmatpush1.msra.mxu0 %v320
    %363 = vmatprep.subr.mxu0 0.0
    %364 = vmatpush1.msra.mxu0 %v319
    %365 = vmatprep.subr.mxu0 0.0
    %366 = vmatpush1.msra.mxu0 %v318
    %367 = vmatprep.subr.mxu0 0.0
    %368 = vmatpush1.msra.mxu0 %v317
    %369 = vmatprep.subr.mxu0 0.0
    %370 = vmatpush1.msra.mxu0 %v316
    %371 = vmatprep.subr.mxu0 0.0
    %372 = vmatpush1.msra.mxu0 %v315
    %373 = vmatprep.subr.mxu0 0.0
    %374 = vmatpush1.msra.mxu0 %v314
    %375 = vmatprep.subr.mxu0 0.0
    %376 = vmatpush1.msra.mxu0 %v313
    %377 = vmatprep.subr.mxu0 0.0
    %378 = vmatpush2.msra.mxu0 %v344
    %379 = vmatprep.subr.mxu0 0.0
    %380 = vmatpush2.msra.mxu0 %v343
    %381 = vmatprep.subr.mxu0 0.0
    %382 = vmatpush2.msra.mxu0 %v342
    %383 = vmatprep.subr.mxu0 0.0
    %384 = vmatpush2.msra.mxu0 %v341
    %385 = vmatprep.subr.mxu0 0.0
    %386 = vmatpush2.msra.mxu0 %v340
    %387 = vmatprep.subr.mxu0 0.0
    %388 = vmatpush2.msra.mxu0 %v339
    %389 = vmatprep.subr.mxu0 0.0
    %390 = vmatpush2.msra.mxu0 %v338
    %391 = vmatprep.subr.mxu0 0.0
    %392 = vmatpush2.msra.mxu0 %v337
    %393 = vmatprep.subr.mxu0 0.0
    %394 = vmatpush2.msra.mxu0 %v336
    %395 = vmatprep.subr.mxu0 0.0
    %396 = vmatpush2.msra.mxu0 %v335
    %397 = vmatprep.subr.mxu0 0.0
    %398 = vmatpush2.msra.mxu0 %v334
    %399 = vmatprep.subr.mxu0 0.0
    %400 = vmatpush2.msra.mxu0 %v333
    %401 = vmatprep.subr.mxu0 0.0
    %402 = vmatpush2.msra.mxu0 %v332
    %403 = vmatprep.subr.mxu0 0.0
    %404 = vmatpush2.msra.mxu0 %v331
    %405 = vmatprep.subr.mxu0 0.0
    %406 = vmatpush2.msra.mxu0 %v330
    %407 = vmatprep.subr.mxu0 0.0
    %408 = vmatpush2.msra.mxu0 %v329
    %409 = vmatprep.mubr.f32.mxu0 %v250
    %410 = vmatmul.mubr.f32.gmra.mxu0 %v249
    %v411 = vpop.f32.mrf.mxu0
    %v412 = vadd.f32 0.0, %v411
    %v413 = vpop.f32.mrf.mxu0
    %414 = vmatprep.mubr.f32.mxu0 %v252
    %415 = vmatmul.mubr.f32.gmra.mxu0 %v251
    %v416 = vpop.f32.mrf.mxu0
    %v417 = vadd.f32 0.0, %v416
    %v418 = vpop.f32.mrf.mxu0
    %419 = vmatprep.mubr.f32.mxu0 %v254
    %420 = vmatmul.mubr.f32.gmra.mxu0 %v253
    %v421 = vpop.f32.mrf.mxu0
    %v422 = vadd.f32 0.0, %v421
    %v423 = vpop.f32.mrf.mxu0
    %424 = vmatprep.mubr.f32.mxu0 %v256
    %425 = vmatmul.mubr.f32.gmra.mxu0 %v255
    %v426 = vpop.f32.mrf.mxu0
    %v427 = vadd.f32 0.0, %v426
    %v428 = vpop.f32.mrf.mxu0
    %429 = vmatprep.mubr.f32.mxu0 %v258
    %430 = vmatmul.mubr.f32.gmra.mxu0 %v257
    %v431 = vpop.f32.mrf.mxu0
    %v432 = vadd.f32 0.0, %v431
    %v433 = vpop.f32.mrf.mxu0
    %434 = vmatprep.mubr.f32.mxu0 %v260
    %435 = vmatmul.mubr.f32.gmra.mxu0 %v259
    %v436 = vpop.f32.mrf.mxu0
    %v437 = vadd.f32 0.0, %v436
    %v438 = vpop.f32.mrf.mxu0
    %439 = vmatprep.mubr.f32.mxu0 %v262
    %440 = vmatmul.mubr.f32.gmra.mxu0 %v261
    %v441 = vpop.f32.mrf.mxu0
    %v442 = vadd.f32 0.0, %v441
    %v443 = vpop.f32.mrf.mxu0
    %444 = vmatprep.mubr.f32.mxu0 %v264
    %445 = vmatmul.mubr.f32.gmra.mxu0 %v263
    %v446 = vpop.f32.mrf.mxu0
    %v447 = vadd.f32 0.0, %v446
    %v448 = vpop.f32.mrf.mxu0
    %449 = vmatprep.mubr.f32.mxu0 %v266
    %450 = vmatmul.mubr.f32.gmra.mxu0 %v265
    %v451 = vpop.f32.mrf.mxu0
    %v452 = vadd.f32 0.0, %v451
    %v453 = vpop.f32.mrf.mxu0
    %454 = vmatprep.mubr.f32.mxu0 %v268
    %455 = vmatmul.mubr.f32.gmra.mxu0 %v267
    %v456 = vpop.f32.mrf.mxu0
    %v457 = vadd.f32 0.0, %v456
    %v458 = vpop.f32.mrf.mxu0
    %459 = vmatprep.mubr.f32.mxu0 %v270
    %460 = vmatmul.mubr.f32.gmra.mxu0 %v269
    %v461 = vpop.f32.mrf.mxu0
    %v462 = vadd.f32 0.0, %v461
    %v463 = vpop.f32.mrf.mxu0
    %464 = vmatprep.mubr.f32.mxu0 %v272
    %465 = vmatmul.mubr.f32.gmra.mxu0 %v271
    %v466 = vpop.f32.mrf.mxu0
    %v467 = vadd.f32 0.0, %v466
    %v468 = vpop.f32.mrf.mxu0
    %469 = vmatprep.mubr.f32.mxu0 %v274
    %470 = vmatmul.mubr.f32.gmra.mxu0 %v273
    %v471 = vpop.f32.mrf.mxu0
    %v472 = vadd.f32 0.0, %v471
    %v473 = vpop.f32.mrf.mxu0
    %474 = vmatprep.mubr.f32.mxu0 %v276
    %475 = vmatmul.mubr.f32.gmra.mxu0 %v275
    %v476 = vpop.f32.mrf.mxu0
    %v477 = vadd.f32 0.0, %v476
    %v478 = vpop.f32.mrf.mxu0
    %479 = vmatprep.mubr.f32.mxu0 %v278
    %480 = vmatmul.mubr.f32.gmra.mxu0 %v277
    %v481 = vpop.f32.mrf.mxu0
    %v482 = vadd.f32 0.0, %v481
    %v483 = vpop.f32.mrf.mxu0
    %484 = vmatprep.mubr.f32.mxu0 %v280
    %485 = vmatmul.mubr.f32.gmra.mxu0 %v279
    %v486 = vpop.f32.mrf.mxu0
    %v487 = vadd.f32 0.0, %v486
    %v488 = vpop.f32.mrf.mxu0
    %489 = vdwg.mxu0
    %490 = vmatprep.subr.mxu0 0.0
    %491 = vmatpush1.msra.mxu0 %v296
    %492 = vmatprep.subr.mxu0 0.0
    %493 = vmatpush1.msra.mxu0 %v295
    %494 = vmatprep.subr.mxu0 0.0
    %495 = vmatpush1.msra.mxu0 %v294
    %496 = vmatprep.subr.mxu0 0.0
    %497 = vmatpush1.msra.mxu0 %v293
    %498 = vmatprep.subr.mxu0 0.0
    %499 = vmatpush1.msra.mxu0 %v292
    %500 = vmatprep.subr.mxu0 0.0
    %501 = vmatpush1.msra.mxu0 %v291
    %502 = vmatprep.subr.mxu0 0.0
    %503 = vmatpush1.msra.mxu0 %v290
    %504 = vmatprep.subr.mxu0 0.0
    %505 = vmatpush1.msra.mxu0 %v289
    %506 = vmatprep.subr.mxu0 0.0
    %507 = vmatpush1.msra.mxu0 %v288
    %508 = vmatprep.subr.mxu0 0.0
    %509 = vmatpush1.msra.mxu0 %v287
    %510 = vmatprep.subr.mxu0 0.0
    %511 = vmatpush1.msra.mxu0 %v286
    %512 = vmatprep.subr.mxu0 0.0
    %513 = vmatpush1.msra.mxu0 %v285
    %514 = vmatprep.subr.mxu0 0.0
    %515 = vmatpush1.msra.mxu0 %v284
    %516 = vmatprep.subr.mxu0 0.0
    %517 = vmatpush1.msra.mxu0 %v283
    %518 = vmatprep.subr.mxu0 0.0
    %519 = vmatpush1.msra.mxu0 %v282
    %520 = vmatprep.subr.mxu0 0.0
    %521 = vmatpush1.msra.mxu0 %v281
    %522 = vmatprep.subr.mxu0 0.0
    %523 = vmatpush2.msra.mxu0 %v312
    %524 = vmatprep.subr.mxu0 0.0
    %525 = vmatpush2.msra.mxu0 %v311
    %526 = vmatprep.subr.mxu0 0.0
    %527 = vmatpush2.msra.mxu0 %v310
    %528 = vmatprep.subr.mxu0 0.0
    %529 = vmatpush2.msra.mxu0 %v309
    %530 = vmatprep.subr.mxu0 0.0
    %531 = vmatpush2.msra.mxu0 %v308
    %532 = vmatprep.subr.mxu0 0.0
    %533 = vmatpush2.msra.mxu0 %v307
    %534 = vmatprep.subr.mxu0 0.0
    %535 = vmatpush2.msra.mxu0 %v306
    %536 = vmatprep.subr.mxu0 0.0
    %537 = vmatpush2.msra.mxu0 %v305
    %538 = vmatprep.subr.mxu0 0.0
    %539 = vmatpush2.msra.mxu0 %v304
    %540 = vmatprep.subr.mxu0 0.0
    %541 = vmatpush2.msra.mxu0 %v303
    %542 = vmatprep.subr.mxu0 0.0
    %543 = vmatpush2.msra.mxu0 %v302
    %544 = vmatprep.subr.mxu0 0.0
    %545 = vmatpush2.msra.mxu0 %v301
    %546 = vmatprep.subr.mxu0 0.0
    %547 = vmatpush2.msra.mxu0 %v300
    %548 = vmatprep.subr.mxu0 0.0
    %549 = vmatpush2.msra.mxu0 %v299
    %550 = vmatprep.subr.mxu0 0.0
    %551 = vmatpush2.msra.mxu0 %v298
    %552 = vmatprep.subr.mxu0 0.0
    %553 = vmatpush2.msra.mxu0 %v297
    %554 = vmatprep.mubr.f32.mxu0 %v71
    %555 = vmatmul.mubr.f32.gmra.mxu0 %v70
    %v556 = vpop.f32.mrf.mxu0
    %v557 = vadd.f32 %v412, %v556
    %v558 = vpop.f32.mrf.mxu0
    %559 = vmatprep.mubr.f32.mxu0 %v73
    %560 = vmatmul.mubr.f32.gmra.mxu0 %v72
    %v561 = vpop.f32.mrf.mxu0
    %v562 = vadd.f32 %v417, %v561
    %v563 = vpop.f32.mrf.mxu0
    %564 = vmatprep.mubr.f32.mxu0 %v75
    %565 = vmatmul.mubr.f32.gmra.mxu0 %v74
    %v566 = vpop.f32.mrf.mxu0
    %v567 = vadd.f32 %v422, %v566
    %v568 = vpop.f32.mrf.mxu0
    %569 = vmatprep.mubr.f32.mxu0 %v77
    %570 = vmatmul.mubr.f32.gmra.mxu0 %v76
    %v571 = vpop.f32.mrf.mxu0
    %v572 = vadd.f32 %v427, %v571
    %v573 = vpop.f32.mrf.mxu0
    %574 = vmatprep.mubr.f32.mxu0 %v79
    %575 = vmatmul.mubr.f32.gmra.mxu0 %v78
    %v576 = vpop.f32.mrf.mxu0
    %v577 = vadd.f32 %v432, %v576
    %v578 = vpop.f32.mrf.mxu0
    %579 = vmatprep.mubr.f32.mxu0 %v81
    %580 = vmatmul.mubr.f32.gmra.mxu0 %v80
    %v581 = vpop.f32.mrf.mxu0
    %v582 = vadd.f32 %v437, %v581
    %v583 = vpop.f32.mrf.mxu0
    %584 = vmatprep.mubr.f32.mxu0 %v83
    %585 = vmatmul.mubr.f32.gmra.mxu0 %v82
    %v586 = vpop.f32.mrf.mxu0
    %v587 = vadd.f32 %v442, %v586
    %v588 = vpop.f32.mrf.mxu0
    %589 = vmatprep.mubr.f32.mxu0 %v85
    %590 = vmatmul.mubr.f32.gmra.mxu0 %v84
    %v591 = vpop.f32.mrf.mxu0
    %v592 = vadd.f32 %v447, %v591
    %v593 = vpop.f32.mrf.mxu0
    %594 = vmatprep.mubr.f32.mxu0 %v87
    %595 = vmatmul.mubr.f32.gmra.mxu0 %v86
    %v596 = vpop.f32.mrf.mxu0
    %v597 = vadd.f32 %v452, %v596
    %v598 = vpop.f32.mrf.mxu0
    %599 = vmatprep.mubr.f32.mxu0 %v89
    %600 = vmatmul.mubr.f32.gmra.mxu0 %v88
    %v601 = vpop.f32.mrf.mxu0
    %v602 = vadd.f32 %v457, %v601
    %v603 = vpop.f32.mrf.mxu0
    %604 = vmatprep.mubr.f32.mxu0 %v91
    %605 = vmatmul.mubr.f32.gmra.mxu0 %v90
    %v606 = vpop.f32.mrf.mxu0
    %v607 = vadd.f32 %v462, %v606
    %v608 = vpop.f32.mrf.mxu0
    %609 = vmatprep.mubr.f32.mxu0 %v93
    %610 = vmatmul.mubr.f32.gmra.mxu0 %v92
    %v611 = vpop.f32.mrf.mxu0
    %v612 = vadd.f32 %v467, %v611
    %v613 = vpop.f32.mrf.mxu0
    %614 = vmatprep.mubr.f32.mxu0 %v95
    %615 = vmatmul.mubr.f32.gmra.mxu0 %v94
    %v616 = vpop.f32.mrf.mxu0
    %v617 = vadd.f32 %v472, %v616
    %v618 = vpop.f32.mrf.mxu0
    %619 = vmatprep.mubr.f32.mxu0 %v97
    %620 = vmatmul.mubr.f32.gmra.mxu0 %v96
    %v621 = vpop.f32.mrf.mxu0
    %v622 = vadd.f32 %v477, %v621
    %v623 = vpop.f32.mrf.mxu0
    %624 = vmatprep.mubr.f32.mxu0 %v99
    %625 = vmatmul.mubr.f32.gmra.mxu0 %v98
    %v626 = vpop.f32.mrf.mxu0
    %v627 = vadd.f32 %v482, %v626
    %v628 = vpop.f32.mrf.mxu0
    %629 = vmatprep.mubr.f32.mxu0 %v101
    %630 = vmatmul.mubr.f32.gmra.mxu0 %v100
    %v631 = vpop.f32.mrf.mxu0
    %v632 = vadd.f32 %v487, %v631
    %v633 = vpop.f32.mrf.mxu0
    %634 = vdwg.mxu0
    %v635 = vld [vmem:[%s3] sm:$0x1]
    %v637 = vlaneseq
    %v638 = vshrl.u32 %v637, 7
    %v639 = vsub.s32 0, %v638
    %v640 = vrot.slane %v635, %v639
    %v642 = vadd.f32 %v557, %v640
    %v643 = vadd.f32 %v562, %v640
    %v644 = vadd.f32 %v567, %v640
    %v645 = vadd.f32 %v572, %v640
    %v646 = vadd.f32 %v577, %v640
    %v647 = vadd.f32 %v582, %v640
    %v648 = vadd.f32 %v587, %v640
    %v649 = vadd.f32 %v592, %v640
    %v650 = vadd.f32 %v597, %v640
    %v651 = vadd.f32 %v602, %v640
    %v652 = vadd.f32 %v607, %v640
    %v653 = vadd.f32 %v612, %v640
    %v654 = vadd.f32 %v617, %v640
    %v655 = vadd.f32 %v622, %v640
    %v656 = vadd.f32 %v627, %v640
    %v657 = vadd.f32 %v632, %v640
    %v658 = vrot.slane %v642, 6
    %v659 = vrot.slane %v643, 6
    %v660 = vrot.slane %v644, 6
    %v661 = vrot.slane %v645, 6
    %v662 = vrot.slane %v646, 6
    %v663 = vrot.slane %v647, 6
    %v664 = vrot.slane %v648, 6
    %v665 = vrot.slane %v649, 6
    %v666 = vrot.slane %v650, 6
    %v667 = vrot.slane %v651, 6
    %v668 = vrot.slane %v652, 6
    %v669 = vrot.slane %v653, 6
    %v670 = vrot.slane %v654, 6
    %v671 = vrot.slane %v655, 6
    %v672 = vrot.slane %v656, 6
    %v673 = vrot.slane %v657, 6
    %vm674 = vcmp.lt.s32.totalorder %v135, 2
    %v675 = vsel %vm674, %v672, %v673
    %v676 = vsel %vm674, %v671, %v672
    %v677 = vsel %vm674, %v670, %v671
    %v678 = vsel %vm674, %v669, %v670
    %v679 = vsel %vm674, %v668, %v669
    %v680 = vsel %vm674, %v667, %v668
    %v681 = vsel %vm674, %v666, %v667
    %v682 = vsel %vm674, %v665, %v666
    %v683 = vsel %vm674, %v664, %v665
    %v684 = vsel %vm674, %v663, %v664
    %v685 = vsel %vm674, %v662, %v663
    %v686 = vsel %vm674, %v661, %v662
    %v687 = vsel %vm674, %v660, %v661
    %v688 = vsel %vm674, %v659, %v660
    %v689 = vsel %vm674, %v658, %v659
    %v690 = vsel %vm674, %v673, %v658
    %691 = vset.pattern.permute.xlu0 1
    %692 = vperm.xlu0 %691, %v54
    %v693 = vpop.permute.xlu0 %692
    %695 = vset.pattern.permute.xlu0 1
    %696 = vperm.xlu0 %695, %v55
    %v697 = vpop.permute.xlu0 %696
    %699 = vset.pattern.permute.xlu0 1
    %700 = vperm.xlu0 %699, %v56
    %v701 = vpop.permute.xlu0 %700
    %703 = vset.pattern.permute.xlu0 1
    %704 = vperm.xlu0 %703, %v57
    %v705 = vpop.permute.xlu0 %704
    %707 = vset.pattern.permute.xlu0 1
    %708 = vperm.xlu0 %707, %v58
    %v709 = vpop.permute.xlu0 %708
    %711 = vset.pattern.permute.xlu0 1
    %712 = vperm.xlu0 %711, %v59
    %v713 = vpop.permute.xlu0 %712
    %715 = vset.pattern.permute.xlu0 1
    %716 = vperm.xlu0 %715, %v60
    %v717 = vpop.permute.xlu0 %716
    %719 = vset.pattern.permute.xlu0 1
    %720 = vperm.xlu0 %719, %v61
    %v721 = vpop.permute.xlu0 %720
    %723 = vset.pattern.permute.xlu0 1
    %724 = vperm.xlu0 %723, %v62
    %v725 = vpop.permute.xlu0 %724
    %727 = vset.pattern.permute.xlu0 1
    %728 = vperm.xlu0 %727, %v63
    %v729 = vpop.permute.xlu0 %728
    %731 = vset.pattern.permute.xlu0 1
    %732 = vperm.xlu0 %731, %v64
    %v733 = vpop.permute.xlu0 %732
    %735 = vset.pattern.permute.xlu0 1
    %736 = vperm.xlu0 %735, %v65
    %v737 = vpop.permute.xlu0 %736
    %739 = vset.pattern.permute.xlu0 1
    %740 = vperm.xlu0 %739, %v66
    %v741 = vpop.permute.xlu0 %740
    %743 = vset.pattern.permute.xlu0 1
    %744 = vperm.xlu0 %743, %v67
    %v745 = vpop.permute.xlu0 %744
    %747 = vset.pattern.permute.xlu0 1
    %748 = vperm.xlu0 %747, %v68
    %v749 = vpop.permute.xlu0 %748
    %751 = vset.pattern.permute.xlu0 1
    %752 = vperm.xlu0 %751, %v69
    %v753 = vpop.permute.xlu0 %752
    %v755 = vmul.f32 %v690, %v693
    %v756 = vmul.f32 %v689, %v697
    %v757 = vmul.f32 %v688, %v701
    %v758 = vmul.f32 %v687, %v705
    %v759 = vmul.f32 %v686, %v709
    %v760 = vmul.f32 %v685, %v713
    %v761 = vmul.f32 %v684, %v717
    %v762 = vmul.f32 %v683, %v721
    %v763 = vmul.f32 %v682, %v725
    %v764 = vmul.f32 %v681, %v729
    %v765 = vmul.f32 %v680, %v733
    %v766 = vmul.f32 %v679, %v737
    %v767 = vmul.f32 %v678, %v741
    %v768 = vmul.f32 %v677, %v745
    %v769 = vmul.f32 %v676, %v749
    %v770 = vmul.f32 %v675, %v753
    %v771 = vld [vmem:[%s4] sm:$0xff]
    %v772 = vld [vmem:[%s4 + $0x8] sm:$0xff]
    %v773 = vld [vmem:[%s4 + $0x10] sm:$0xff]
    %v774 = vld [vmem:[%s4 + $0x18] sm:$0xff]
    %v775 = vld [vmem:[%s5] sm:$0xff]
    %v776 = vld [vmem:[%s5 + $0x8] sm:$0xff]
    %v777 = vld [vmem:[%s5 + $0x10] sm:$0xff]
    %v778 = vld [vmem:[%s5 + $0x18] sm:$0xff]
    %vm779 = vcmask 261120
    %v781 = vsel %vm779, %v755, 0
    %v784 = vsel %vm779, %v756, 0
    %v787 = vsel %vm779, %v757, 0
    %v790 = vsel %vm779, %v758, 0
    %v793 = vsel %vm779, %v759, 0
    %v796 = vsel %vm779, %v760, 0
    %v799 = vsel %vm779, %v761, 0
    %v802 = vsel %vm779, %v762, 0
    %v805 = vsel %vm779, %v763, 0
    %v808 = vsel %vm779, %v764, 0
    %v811 = vsel %vm779, %v765, 0
    %v814 = vsel %vm779, %v766, 0
    %v817 = vsel %vm779, %v767, 0
    %v820 = vsel %vm779, %v768, 0
    %v823 = vsel %vm779, %v769, 0
    %v826 = vsel %vm779, %v770, 0
    %828 = vmatprep.subr.mxu0 0.0
    %829 = vmatpush1.msra.mxu0 0.0
    %830 = vmatprep.subr.mxu0 0.0
    %831 = vmatpush1.msra.mxu0 0.0
    %832 = vmatprep.subr.mxu0 0.0
    %833 = vmatpush1.msra.mxu0 0.0
    %834 = vmatprep.subr.mxu0 0.0
    %835 = vmatpush1.msra.mxu0 0.0
    %836 = vmatprep.subr.mxu0 0.0
    %837 = vmatpush1.msra.mxu0 0.0
    %838 = vmatprep.subr.mxu0 0.0
    %839 = vmatpush1.msra.mxu0 0.0
    %840 = vmatprep.subr.mxu0 0.0
    %841 = vmatpush1.msra.mxu0 0.0
    %842 = vmatprep.subr.mxu0 0.0
    %843 = vmatpush1.msra.mxu0 0.0
    %844 = vmatprep.subr.mxu0 0.0
    %845 = vmatpush1.msra.mxu0 0.0
    %846 = vmatprep.subr.mxu0 0.0
    %847 = vmatpush1.msra.mxu0 0.0
    %848 = vmatprep.subr.mxu0 0.0
    %849 = vmatpush1.msra.mxu0 0.0
    %850 = vmatprep.subr.mxu0 0.0
    %851 = vmatpush1.msra.mxu0 0.0
    %852 = vmatprep.subr.mxu0 0.0
    %853 = vmatpush1.msra.mxu0 %v778
    %854 = vmatprep.subr.mxu0 0.0
    %855 = vmatpush1.msra.mxu0 %v777
    %856 = vmatprep.subr.mxu0 0.0
    %857 = vmatpush1.msra.mxu0 %v776
    %858 = vmatprep.subr.mxu0 0.0
    %859 = vmatpush1.msra.mxu0 %v775
    %860 = vmatprep.subr.mxu0 0.0
    %861 = vmatpush2.msra.mxu0 0.0
    %862 = vmatprep.subr.mxu0 0.0
    %863 = vmatpush2.msra.mxu0 0.0
    %864 = vmatprep.subr.mxu0 0.0
    %865 = vmatpush2.msra.mxu0 0.0
    %866 = vmatprep.subr.mxu0 0.0
    %867 = vmatpush2.msra.mxu0 0.0
    %868 = vmatprep.subr.mxu0 0.0
    %869 = vmatpush2.msra.mxu0 0.0
    %870 = vmatprep.subr.mxu0 0.0
    %871 = vmatpush2.msra.mxu0 0.0
    %872 = vmatprep.subr.mxu0 0.0
    %873 = vmatpush2.msra.mxu0 0.0
    %874 = vmatprep.subr.mxu0 0.0
    %875 = vmatpush2.msra.mxu0 0.0
    %876 = vmatprep.subr.mxu0 0.0
    %877 = vmatpush2.msra.mxu0 0.0
    %878 = vmatprep.subr.mxu0 0.0
    %879 = vmatpush2.msra.mxu0 0.0
    %880 = vmatprep.subr.mxu0 0.0
    %881 = vmatpush2.msra.mxu0 0.0
    %882 = vmatprep.subr.mxu0 0.0
    %883 = vmatpush2.msra.mxu0 0.0
    %884 = vmatprep.subr.mxu0 0.0
    %885 = vmatpush2.msra.mxu0 0.0
    %886 = vmatprep.subr.mxu0 0.0
    %887 = vmatpush2.msra.mxu0 0.0
    %888 = vmatprep.subr.mxu0 0.0
    %889 = vmatpush2.msra.mxu0 0.0
    %890 = vmatprep.subr.mxu0 0.0
    %891 = vmatpush2.msra.mxu0 0.0
    %892 = vmatprep.mubr.f32.mxu0 0.0
    %893 = vmatmul.mubr.f32.gmra.mxu0 %v781
    %v894 = vpop.f32.mrf.mxu0
    %v895 = vadd.f32 0.0, %v894
    %v896 = vpop.f32.mrf.mxu0
    %897 = vmatprep.mubr.f32.mxu0 0.0
    %898 = vmatmul.mubr.f32.gmra.mxu0 %v784
    %v899 = vpop.f32.mrf.mxu0
    %v900 = vadd.f32 0.0, %v899
    %v901 = vpop.f32.mrf.mxu0
    %902 = vmatprep.mubr.f32.mxu0 0.0
    %903 = vmatmul.mubr.f32.gmra.mxu0 %v787
    %v904 = vpop.f32.mrf.mxu0
    %v905 = vadd.f32 0.0, %v904
    %v906 = vpop.f32.mrf.mxu0
    %907 = vmatprep.mubr.f32.mxu0 0.0
    %908 = vmatmul.mubr.f32.gmra.mxu0 %v790
    %v909 = vpop.f32.mrf.mxu0
    %v910 = vadd.f32 0.0, %v909
    %v911 = vpop.f32.mrf.mxu0
    %912 = vmatprep.mubr.f32.mxu0 0.0
    %913 = vmatmul.mubr.f32.gmra.mxu0 %v793
    %v914 = vpop.f32.mrf.mxu0
    %v915 = vadd.f32 0.0, %v914
    %v916 = vpop.f32.mrf.mxu0
    %917 = vmatprep.mubr.f32.mxu0 0.0
    %918 = vmatmul.mubr.f32.gmra.mxu0 %v796
    %v919 = vpop.f32.mrf.mxu0
    %v920 = vadd.f32 0.0, %v919
    %v921 = vpop.f32.mrf.mxu0
    %922 = vmatprep.mubr.f32.mxu0 0.0
    %923 = vmatmul.mubr.f32.gmra.mxu0 %v799
    %v924 = vpop.f32.mrf.mxu0
    %v925 = vadd.f32 0.0, %v924
    %v926 = vpop.f32.mrf.mxu0
    %927 = vmatprep.mubr.f32.mxu0 0.0
    %928 = vmatmul.mubr.f32.gmra.mxu0 %v802
    %v929 = vpop.f32.mrf.mxu0
    %v930 = vadd.f32 0.0, %v929
    %v931 = vpop.f32.mrf.mxu0
    %932 = vmatprep.mubr.f32.mxu0 0.0
    %933 = vmatmul.mubr.f32.gmra.mxu0 %v805
    %v934 = vpop.f32.mrf.mxu0
    %v935 = vadd.f32 0.0, %v934
    %v936 = vpop.f32.mrf.mxu0
    %937 = vmatprep.mubr.f32.mxu0 0.0
    %938 = vmatmul.mubr.f32.gmra.mxu0 %v808
    %v939 = vpop.f32.mrf.mxu0
    %v940 = vadd.f32 0.0, %v939
    %v941 = vpop.f32.mrf.mxu0
    %942 = vmatprep.mubr.f32.mxu0 0.0
    %943 = vmatmul.mubr.f32.gmra.mxu0 %v811
    %v944 = vpop.f32.mrf.mxu0
    %v945 = vadd.f32 0.0, %v944
    %v946 = vpop.f32.mrf.mxu0
    %947 = vmatprep.mubr.f32.mxu0 0.0
    %948 = vmatmul.mubr.f32.gmra.mxu0 %v814
    %v949 = vpop.f32.mrf.mxu0
    %v950 = vadd.f32 0.0, %v949
    %v951 = vpop.f32.mrf.mxu0
    %952 = vmatprep.mubr.f32.mxu0 0.0
    %953 = vmatmul.mubr.f32.gmra.mxu0 %v817
    %v954 = vpop.f32.mrf.mxu0
    %v955 = vadd.f32 0.0, %v954
    %v956 = vpop.f32.mrf.mxu0
    %957 = vmatprep.mubr.f32.mxu0 0.0
    %958 = vmatmul.mubr.f32.gmra.mxu0 %v820
    %v959 = vpop.f32.mrf.mxu0
    %v960 = vadd.f32 0.0, %v959
    %v961 = vpop.f32.mrf.mxu0
    %962 = vmatprep.mubr.f32.mxu0 0.0
    %963 = vmatmul.mubr.f32.gmra.mxu0 %v823
    %v964 = vpop.f32.mrf.mxu0
    %v965 = vadd.f32 0.0, %v964
    %v966 = vpop.f32.mrf.mxu0
    %967 = vmatprep.mubr.f32.mxu0 0.0
    %968 = vmatmul.mubr.f32.gmra.mxu0 %v826
    %v969 = vpop.f32.mrf.mxu0
    %v970 = vadd.f32 0.0, %v969
    %v971 = vpop.f32.mrf.mxu0
    %972 = vdwg.mxu0
    %v974 = vsel %vm779, %v642, 0
    %v977 = vsel %vm779, %v643, 0
    %v980 = vsel %vm779, %v644, 0
    %v983 = vsel %vm779, %v645, 0
    %v986 = vsel %vm779, %v646, 0
    %v989 = vsel %vm779, %v647, 0
    %v992 = vsel %vm779, %v648, 0
    %v995 = vsel %vm779, %v649, 0
    %v998 = vsel %vm779, %v650, 0
    %v1001 = vsel %vm779, %v651, 0
    %v1004 = vsel %vm779, %v652, 0
    %v1007 = vsel %vm779, %v653, 0
    %v1010 = vsel %vm779, %v654, 0
    %v1013 = vsel %vm779, %v655, 0
    %v1016 = vsel %vm779, %v656, 0
    %v1019 = vsel %vm779, %v657, 0
    %1021 = vmatprep.subr.mxu0 0.0
    %1022 = vmatpush1.msra.mxu0 0.0
    %1023 = vmatprep.subr.mxu0 0.0
    %1024 = vmatpush1.msra.mxu0 0.0
    %1025 = vmatprep.subr.mxu0 0.0
    %1026 = vmatpush1.msra.mxu0 0.0
    %1027 = vmatprep.subr.mxu0 0.0
    %1028 = vmatpush1.msra.mxu0 0.0
    %1029 = vmatprep.subr.mxu0 0.0
    %1030 = vmatpush1.msra.mxu0 0.0
    %1031 = vmatprep.subr.mxu0 0.0
    %1032 = vmatpush1.msra.mxu0 0.0
    %1033 = vmatprep.subr.mxu0 0.0
    %1034 = vmatpush1.msra.mxu0 0.0
    %1035 = vmatprep.subr.mxu0 0.0
    %1036 = vmatpush1.msra.mxu0 0.0
    %1037 = vmatprep.subr.mxu0 0.0
    %1038 = vmatpush1.msra.mxu0 0.0
    %1039 = vmatprep.subr.mxu0 0.0
    %1040 = vmatpush1.msra.mxu0 0.0
    %1041 = vmatprep.subr.mxu0 0.0
    %1042 = vmatpush1.msra.mxu0 0.0
    %1043 = vmatprep.subr.mxu0 0.0
    %1044 = vmatpush1.msra.mxu0 0.0
    %1045 = vmatprep.subr.mxu0 0.0
    %1046 = vmatpush1.msra.mxu0 %v774
    %1047 = vmatprep.subr.mxu0 0.0
    %1048 = vmatpush1.msra.mxu0 %v773
    %1049 = vmatprep.subr.mxu0 0.0
    %1050 = vmatpush1.msra.mxu0 %v772
    %1051 = vmatprep.subr.mxu0 0.0
    %1052 = vmatpush1.msra.mxu0 %v771
    %1053 = vmatprep.subr.mxu0 0.0
    %1054 = vmatpush2.msra.mxu0 0.0
    %1055 = vmatprep.subr.mxu0 0.0
    %1056 = vmatpush2.msra.mxu0 0.0
    %1057 = vmatprep.subr.mxu0 0.0
    %1058 = vmatpush2.msra.mxu0 0.0
    %1059 = vmatprep.subr.mxu0 0.0
    %1060 = vmatpush2.msra.mxu0 0.0
    %1061 = vmatprep.subr.mxu0 0.0
    %1062 = vmatpush2.msra.mxu0 0.0
    %1063 = vmatprep.subr.mxu0 0.0
    %1064 = vmatpush2.msra.mxu0 0.0
    %1065 = vmatprep.subr.mxu0 0.0
    %1066 = vmatpush2.msra.mxu0 0.0
    %1067 = vmatprep.subr.mxu0 0.0
    %1068 = vmatpush2.msra.mxu0 0.0
    %1069 = vmatprep.subr.mxu0 0.0
    %1070 = vmatpush2.msra.mxu0 0.0
    %1071 = vmatprep.subr.mxu0 0.0
    %1072 = vmatpush2.msra.mxu0 0.0
    %1073 = vmatprep.subr.mxu0 0.0
    %1074 = vmatpush2.msra.mxu0 0.0
    %1075 = vmatprep.subr.mxu0 0.0
    %1076 = vmatpush2.msra.mxu0 0.0
    %1077 = vmatprep.subr.mxu0 0.0
    %1078 = vmatpush2.msra.mxu0 0.0
    %1079 = vmatprep.subr.mxu0 0.0
    %1080 = vmatpush2.msra.mxu0 0.0
    %1081 = vmatprep.subr.mxu0 0.0
    %1082 = vmatpush2.msra.mxu0 0.0
    %1083 = vmatprep.subr.mxu0 0.0
    %1084 = vmatpush2.msra.mxu0 0.0
    %1085 = vmatprep.mubr.f32.mxu0 0.0
    %1086 = vmatmul.mubr.f32.gmra.mxu0 %v974
    %v1087 = vpop.f32.mrf.mxu0
    %v1088 = vadd.f32 %v895, %v1087
    %v1089 = vpop.f32.mrf.mxu0
    %1090 = vmatprep.mubr.f32.mxu0 0.0
    %1091 = vmatmul.mubr.f32.gmra.mxu0 %v977
    %v1092 = vpop.f32.mrf.mxu0
    %v1093 = vadd.f32 %v900, %v1092
    %v1094 = vpop.f32.mrf.mxu0
    %1095 = vmatprep.mubr.f32.mxu0 0.0
    %1096 = vmatmul.mubr.f32.gmra.mxu0 %v980
    %v1097 = vpop.f32.mrf.mxu0
    %v1098 = vadd.f32 %v905, %v1097
    %v1099 = vpop.f32.mrf.mxu0
    %1100 = vmatprep.mubr.f32.mxu0 0.0
    %1101 = vmatmul.mubr.f32.gmra.mxu0 %v983
    %v1102 = vpop.f32.mrf.mxu0
    %v1103 = vadd.f32 %v910, %v1102
    %v1104 = vpop.f32.mrf.mxu0
    %1105 = vmatprep.mubr.f32.mxu0 0.0
    %1106 = vmatmul.mubr.f32.gmra.mxu0 %v986
    %v1107 = vpop.f32.mrf.mxu0
    %v1108 = vadd.f32 %v915, %v1107
    %v1109 = vpop.f32.mrf.mxu0
    %1110 = vmatprep.mubr.f32.mxu0 0.0
    %1111 = vmatmul.mubr.f32.gmra.mxu0 %v989
    %v1112 = vpop.f32.mrf.mxu0
    %v1113 = vadd.f32 %v920, %v1112
    %v1114 = vpop.f32.mrf.mxu0
    %1115 = vmatprep.mubr.f32.mxu0 0.0
    %1116 = vmatmul.mubr.f32.gmra.mxu0 %v992
    %v1117 = vpop.f32.mrf.mxu0
    %v1118 = vadd.f32 %v925, %v1117
    %v1119 = vpop.f32.mrf.mxu0
    %1120 = vmatprep.mubr.f32.mxu0 0.0
    %1121 = vmatmul.mubr.f32.gmra.mxu0 %v995
    %v1122 = vpop.f32.mrf.mxu0
    %v1123 = vadd.f32 %v930, %v1122
    %v1124 = vpop.f32.mrf.mxu0
    %1125 = vmatprep.mubr.f32.mxu0 0.0
    %1126 = vmatmul.mubr.f32.gmra.mxu0 %v998
    %v1127 = vpop.f32.mrf.mxu0
    %v1128 = vadd.f32 %v935, %v1127
    %v1129 = vpop.f32.mrf.mxu0
    %1130 = vmatprep.mubr.f32.mxu0 0.0
    %1131 = vmatmul.mubr.f32.gmra.mxu0 %v1001
    %v1132 = vpop.f32.mrf.mxu0
    %v1133 = vadd.f32 %v940, %v1132
    %v1134 = vpop.f32.mrf.mxu0
    %1135 = vmatprep.mubr.f32.mxu0 0.0
    %1136 = vmatmul.mubr.f32.gmra.mxu0 %v1004
    %v1137 = vpop.f32.mrf.mxu0
    %v1138 = vadd.f32 %v945, %v1137
    %v1139 = vpop.f32.mrf.mxu0
    %1140 = vmatprep.mubr.f32.mxu0 0.0
    %1141 = vmatmul.mubr.f32.gmra.mxu0 %v1007
    %v1142 = vpop.f32.mrf.mxu0
    %v1143 = vadd.f32 %v950, %v1142
    %v1144 = vpop.f32.mrf.mxu0
    %1145 = vmatprep.mubr.f32.mxu0 0.0
    %1146 = vmatmul.mubr.f32.gmra.mxu0 %v1010
    %v1147 = vpop.f32.mrf.mxu0
    %v1148 = vadd.f32 %v955, %v1147
    %v1149 = vpop.f32.mrf.mxu0
    %1150 = vmatprep.mubr.f32.mxu0 0.0
    %1151 = vmatmul.mubr.f32.gmra.mxu0 %v1013
    %v1152 = vpop.f32.mrf.mxu0
    %v1153 = vadd.f32 %v960, %v1152
    %v1154 = vpop.f32.mrf.mxu0
    %1155 = vmatprep.mubr.f32.mxu0 0.0
    %1156 = vmatmul.mubr.f32.gmra.mxu0 %v1016
    %v1157 = vpop.f32.mrf.mxu0
    %v1158 = vadd.f32 %v965, %v1157
    %v1159 = vpop.f32.mrf.mxu0
    %1160 = vmatprep.mubr.f32.mxu0 0.0
    %1161 = vmatmul.mubr.f32.gmra.mxu0 %v1019
    %v1162 = vpop.f32.mrf.mxu0
    %v1163 = vadd.f32 %v970, %v1162
    %v1164 = vpop.f32.mrf.mxu0
    %1165 = vdwg.mxu0
    %v1166 = vld [vmem:[%s6] sm:$0x1]
    %v1168 = vlaneseq
    %v1169 = vshrl.u32 %v1168, 7
    %v1170 = vsub.s32 0, %v1169
    %v1171 = vrot.slane %v1166, %v1170
    %v1173 = vadd.f32 %v1088, %v1171
    %v1174 = vadd.f32 %v1093, %v1171
    %v1175 = vadd.f32 %v1098, %v1171
    %v1176 = vadd.f32 %v1103, %v1171
    %v1177 = vadd.f32 %v1108, %v1171
    %v1178 = vadd.f32 %v1113, %v1171
    %v1179 = vadd.f32 %v1118, %v1171
    %v1180 = vadd.f32 %v1123, %v1171
    %v1181 = vadd.f32 %v1128, %v1171
    %v1182 = vadd.f32 %v1133, %v1171
    %v1183 = vadd.f32 %v1138, %v1171
    %v1184 = vadd.f32 %v1143, %v1171
    %v1185 = vadd.f32 %v1148, %v1171
    %v1186 = vadd.f32 %v1153, %v1171
    %v1187 = vadd.f32 %v1158, %v1171
    %v1188 = vadd.f32 %v1163, %v1171
    %v1189 = vrot.slane %v1173, 4
    %v1190 = vrot.slane %v1174, 4
    %v1191 = vrot.slane %v1175, 4
    %v1192 = vrot.slane %v1176, 4
    %v1193 = vrot.slane %v1177, 4
    %v1194 = vrot.slane %v1178, 4
    %v1195 = vrot.slane %v1179, 4
    %v1196 = vrot.slane %v1180, 4
    %v1197 = vrot.slane %v1181, 4
    %v1198 = vrot.slane %v1182, 4
    %v1199 = vrot.slane %v1183, 4
    %v1200 = vrot.slane %v1184, 4
    %v1201 = vrot.slane %v1185, 4
    %v1202 = vrot.slane %v1186, 4
    %v1203 = vrot.slane %v1187, 4
    %v1204 = vrot.slane %v1188, 4
    %vm1205 = vcmp.lt.s32.totalorder %v135, 4
    %v1206 = vsel %vm1205, %v1203, %v1204
    %v1207 = vsel %vm1205, %v1202, %v1203
    %v1208 = vsel %vm1205, %v1201, %v1202
    %v1209 = vsel %vm1205, %v1200, %v1201
    %v1210 = vsel %vm1205, %v1199, %v1200
    %v1211 = vsel %vm1205, %v1198, %v1199
    %v1212 = vsel %vm1205, %v1197, %v1198
    %v1213 = vsel %vm1205, %v1196, %v1197
    %v1214 = vsel %vm1205, %v1195, %v1196
    %v1215 = vsel %vm1205, %v1194, %v1195
    %v1216 = vsel %vm1205, %v1193, %v1194
    %v1217 = vsel %vm1205, %v1192, %v1193
    %v1218 = vsel %vm1205, %v1191, %v1192
    %v1219 = vsel %vm1205, %v1190, %v1191
    %v1220 = vsel %vm1205, %v1189, %v1190
    %v1221 = vsel %vm1205, %v1204, %v1189
    %1222 = vset.pattern.permute.xlu0 2
    %1223 = vperm.xlu0 %1222, %v54
    %v1224 = vpop.permute.xlu0 %1223
    %1226 = vset.pattern.permute.xlu0 2
    %1227 = vperm.xlu0 %1226, %v55
    %v1228 = vpop.permute.xlu0 %1227
    %1230 = vset.pattern.permute.xlu0 2
    %1231 = vperm.xlu0 %1230, %v56
    %v1232 = vpop.permute.xlu0 %1231
    %1234 = vset.pattern.permute.xlu0 2
    %1235 = vperm.xlu0 %1234, %v57
    %v1236 = vpop.permute.xlu0 %1235
    %1238 = vset.pattern.permute.xlu0 2
    %1239 = vperm.xlu0 %1238, %v58
    %v1240 = vpop.permute.xlu0 %1239
    %1242 = vset.pattern.permute.xlu0 2
    %1243 = vperm.xlu0 %1242, %v59
    %v1244 = vpop.permute.xlu0 %1243
    %1246 = vset.pattern.permute.xlu0 2
    %1247 = vperm.xlu0 %1246, %v60
    %v1248 = vpop.permute.xlu0 %1247
    %1250 = vset.pattern.permute.xlu0 2
    %1251 = vperm.xlu0 %1250, %v61
    %v1252 = vpop.permute.xlu0 %1251
    %1254 = vset.pattern.permute.xlu0 2
    %1255 = vperm.xlu0 %1254, %v62
    %v1256 = vpop.permute.xlu0 %1255
    %1258 = vset.pattern.permute.xlu0 2
    %1259 = vperm.xlu0 %1258, %v63
    %v1260 = vpop.permute.xlu0 %1259
    %1262 = vset.pattern.permute.xlu0 2
    %1263 = vperm.xlu0 %1262, %v64
    %v1264 = vpop.permute.xlu0 %1263
    %1266 = vset.pattern.permute.xlu0 2
    %1267 = vperm.xlu0 %1266, %v65
    %v1268 = vpop.permute.xlu0 %1267
    %1270 = vset.pattern.permute.xlu0 2
    %1271 = vperm.xlu0 %1270, %v66
    %v1272 = vpop.permute.xlu0 %1271
    %1274 = vset.pattern.permute.xlu0 2
    %1275 = vperm.xlu0 %1274, %v67
    %v1276 = vpop.permute.xlu0 %1275
    %1278 = vset.pattern.permute.xlu0 2
    %1279 = vperm.xlu0 %1278, %v68
    %v1280 = vpop.permute.xlu0 %1279
    %1282 = vset.pattern.permute.xlu0 2
    %1283 = vperm.xlu0 %1282, %v69
    %v1284 = vpop.permute.xlu0 %1283
    %v1286 = vmul.f32 %v1221, %v1224
    %v1287 = vmul.f32 %v1220, %v1228
    %v1288 = vmul.f32 %v1219, %v1232
    %v1289 = vmul.f32 %v1218, %v1236
    %v1290 = vmul.f32 %v1217, %v1240
    %v1291 = vmul.f32 %v1216, %v1244
    %v1292 = vmul.f32 %v1215, %v1248
    %v1293 = vmul.f32 %v1214, %v1252
    %v1294 = vmul.f32 %v1213, %v1256
    %v1295 = vmul.f32 %v1212, %v1260
    %v1296 = vmul.f32 %v1211, %v1264
    %v1297 = vmul.f32 %v1210, %v1268
    %v1298 = vmul.f32 %v1209, %v1272
    %v1299 = vmul.f32 %v1208, %v1276
    %v1300 = vmul.f32 %v1207, %v1280
    %v1301 = vmul.f32 %v1206, %v1284
    %v1302 = vld [vmem:[%s7] sm:$0xff]
    %v1303 = vld [vmem:[%s7 + $0x8] sm:$0xff]
    %v1304 = vld [vmem:[%s7 + $0x10] sm:$0xff]
    %v1305 = vld [vmem:[%s7 + $0x18] sm:$0xff]
    %v1306 = vld [vmem:[%s8] sm:$0xff]
    %v1307 = vld [vmem:[%s8 + $0x8] sm:$0xff]
    %v1308 = vld [vmem:[%s8 + $0x10] sm:$0xff]
    %v1309 = vld [vmem:[%s8 + $0x18] sm:$0xff]
    %v1311 = vsel %vm779, %v1286, 0
    %v1314 = vsel %vm779, %v1287, 0
    %v1317 = vsel %vm779, %v1288, 0
    %v1320 = vsel %vm779, %v1289, 0
    %v1323 = vsel %vm779, %v1290, 0
    %v1326 = vsel %vm779, %v1291, 0
    %v1329 = vsel %vm779, %v1292, 0
    %v1332 = vsel %vm779, %v1293, 0
    %v1335 = vsel %vm779, %v1294, 0
    %v1338 = vsel %vm779, %v1295, 0
    %v1341 = vsel %vm779, %v1296, 0
    %v1344 = vsel %vm779, %v1297, 0
    %v1347 = vsel %vm779, %v1298, 0
    %v1350 = vsel %vm779, %v1299, 0
    %v1353 = vsel %vm779, %v1300, 0
    %v1356 = vsel %vm779, %v1301, 0
    %1358 = vmatprep.subr.mxu0 0.0
    %1359 = vmatpush1.msra.mxu0 0.0
    %1360 = vmatprep.subr.mxu0 0.0
    %1361 = vmatpush1.msra.mxu0 0.0
    %1362 = vmatprep.subr.mxu0 0.0
    %1363 = vmatpush1.msra.mxu0 0.0
    %1364 = vmatprep.subr.mxu0 0.0
    %1365 = vmatpush1.msra.mxu0 0.0
    %1366 = vmatprep.subr.mxu0 0.0
    %1367 = vmatpush1.msra.mxu0 0.0
    %1368 = vmatprep.subr.mxu0 0.0
    %1369 = vmatpush1.msra.mxu0 0.0
    %1370 = vmatprep.subr.mxu0 0.0
    %1371 = vmatpush1.msra.mxu0 0.0
    %1372 = vmatprep.subr.mxu0 0.0
    %1373 = vmatpush1.msra.mxu0 0.0
    %1374 = vmatprep.subr.mxu0 0.0
    %1375 = vmatpush1.msra.mxu0 0.0
    %1376 = vmatprep.subr.mxu0 0.0
    %1377 = vmatpush1.msra.mxu0 0.0
    %1378 = vmatprep.subr.mxu0 0.0
    %1379 = vmatpush1.msra.mxu0 0.0
    %1380 = vmatprep.subr.mxu0 0.0
    %1381 = vmatpush1.msra.mxu0 0.0
    %1382 = vmatprep.subr.mxu0 0.0
    %1383 = vmatpush1.msra.mxu0 %v1309
    %1384 = vmatprep.subr.mxu0 0.0
    %1385 = vmatpush1.msra.mxu0 %v1308
    %1386 = vmatprep.subr.mxu0 0.0
    %1387 = vmatpush1.msra.mxu0 %v1307
    %1388 = vmatprep.subr.mxu0 0.0
    %1389 = vmatpush1.msra.mxu0 %v1306
    %1390 = vmatprep.subr.mxu0 0.0
    %1391 = vmatpush2.msra.mxu0 0.0
    %1392 = vmatprep.subr.mxu0 0.0
    %1393 = vmatpush2.msra.mxu0 0.0
    %1394 = vmatprep.subr.mxu0 0.0
    %1395 = vmatpush2.msra.mxu0 0.0
    %1396 = vmatprep.subr.mxu0 0.0
    %1397 = vmatpush2.msra.mxu0 0.0
    %1398 = vmatprep.subr.mxu0 0.0
    %1399 = vmatpush2.msra.mxu0 0.0
    %1400 = vmatprep.subr.mxu0 0.0
    %1401 = vmatpush2.msra.mxu0 0.0
    %1402 = vmatprep.subr.mxu0 0.0
    %1403 = vmatpush2.msra.mxu0 0.0
    %1404 = vmatprep.subr.mxu0 0.0
    %1405 = vmatpush2.msra.mxu0 0.0
    %1406 = vmatprep.subr.mxu0 0.0
    %1407 = vmatpush2.msra.mxu0 0.0
    %1408 = vmatprep.subr.mxu0 0.0
    %1409 = vmatpush2.msra.mxu0 0.0
    %1410 = vmatprep.subr.mxu0 0.0
    %1411 = vmatpush2.msra.mxu0 0.0
    %1412 = vmatprep.subr.mxu0 0.0
    %1413 = vmatpush2.msra.mxu0 0.0
    %1414 = vmatprep.subr.mxu0 0.0
    %1415 = vmatpush2.msra.mxu0 0.0
    %1416 = vmatprep.subr.mxu0 0.0
    %1417 = vmatpush2.msra.mxu0 0.0
    %1418 = vmatprep.subr.mxu0 0.0
    %1419 = vmatpush2.msra.mxu0 0.0
    %1420 = vmatprep.subr.mxu0 0.0
    %1421 = vmatpush2.msra.mxu0 0.0
    %1422 = vmatprep.mubr.f32.mxu0 0.0
    %1423 = vmatmul.mubr.f32.gmra.mxu0 %v1311
    %v1424 = vpop.f32.mrf.mxu0
    %v1425 = vadd.f32 0.0, %v1424
    %v1426 = vpop.f32.mrf.mxu0
    %1427 = vmatprep.mubr.f32.mxu0 0.0
    %1428 = vmatmul.mubr.f32.gmra.mxu0 %v1314
    %v1429 = vpop.f32.mrf.mxu0
    %v1430 = vadd.f32 0.0, %v1429
    %v1431 = vpop.f32.mrf.mxu0
    %1432 = vmatprep.mubr.f32.mxu0 0.0
    %1433 = vmatmul.mubr.f32.gmra.mxu0 %v1317
    %v1434 = vpop.f32.mrf.mxu0
    %v1435 = vadd.f32 0.0, %v1434
    %v1436 = vpop.f32.mrf.mxu0
    %1437 = vmatprep.mubr.f32.mxu0 0.0
    %1438 = vmatmul.mubr.f32.gmra.mxu0 %v1320
    %v1439 = vpop.f32.mrf.mxu0
    %v1440 = vadd.f32 0.0, %v1439
    %v1441 = vpop.f32.mrf.mxu0
    %1442 = vmatprep.mubr.f32.mxu0 0.0
    %1443 = vmatmul.mubr.f32.gmra.mxu0 %v1323
    %v1444 = vpop.f32.mrf.mxu0
    %v1445 = vadd.f32 0.0, %v1444
    %v1446 = vpop.f32.mrf.mxu0
    %1447 = vmatprep.mubr.f32.mxu0 0.0
    %1448 = vmatmul.mubr.f32.gmra.mxu0 %v1326
    %v1449 = vpop.f32.mrf.mxu0
    %v1450 = vadd.f32 0.0, %v1449
    %v1451 = vpop.f32.mrf.mxu0
    %1452 = vmatprep.mubr.f32.mxu0 0.0
    %1453 = vmatmul.mubr.f32.gmra.mxu0 %v1329
    %v1454 = vpop.f32.mrf.mxu0
    %v1455 = vadd.f32 0.0, %v1454
    %v1456 = vpop.f32.mrf.mxu0
    %1457 = vmatprep.mubr.f32.mxu0 0.0
    %1458 = vmatmul.mubr.f32.gmra.mxu0 %v1332
    %v1459 = vpop.f32.mrf.mxu0
    %v1460 = vadd.f32 0.0, %v1459
    %v1461 = vpop.f32.mrf.mxu0
    %1462 = vmatprep.mubr.f32.mxu0 0.0
    %1463 = vmatmul.mubr.f32.gmra.mxu0 %v1335
    %v1464 = vpop.f32.mrf.mxu0
    %v1465 = vadd.f32 0.0, %v1464
    %v1466 = vpop.f32.mrf.mxu0
    %1467 = vmatprep.mubr.f32.mxu0 0.0
    %1468 = vmatmul.mubr.f32.gmra.mxu0 %v1338
    %v1469 = vpop.f32.mrf.mxu0
    %v1470 = vadd.f32 0.0, %v1469
    %v1471 = vpop.f32.mrf.mxu0
    %1472 = vmatprep.mubr.f32.mxu0 0.0
    %1473 = vmatmul.mubr.f32.gmra.mxu0 %v1341
    %v1474 = vpop.f32.mrf.mxu0
    %v1475 = vadd.f32 0.0, %v1474
    %v1476 = vpop.f32.mrf.mxu0
    %1477 = vmatprep.mubr.f32.mxu0 0.0
    %1478 = vmatmul.mubr.f32.gmra.mxu0 %v1344
    %v1479 = vpop.f32.mrf.mxu0
    %v1480 = vadd.f32 0.0, %v1479
    %v1481 = vpop.f32.mrf.mxu0
    %1482 = vmatprep.mubr.f32.mxu0 0.0
    %1483 = vmatmul.mubr.f32.gmra.mxu0 %v1347
    %v1484 = vpop.f32.mrf.mxu0
    %v1485 = vadd.f32 0.0, %v1484
    %v1486 = vpop.f32.mrf.mxu0
    %1487 = vmatprep.mubr.f32.mxu0 0.0
    %1488 = vmatmul.mubr.f32.gmra.mxu0 %v1350
    %v1489 = vpop.f32.mrf.mxu0
    %v1490 = vadd.f32 0.0, %v1489
    %v1491 = vpop.f32.mrf.mxu0
    %1492 = vmatprep.mubr.f32.mxu0 0.0
    %1493 = vmatmul.mubr.f32.gmra.mxu0 %v1353
    %v1494 = vpop.f32.mrf.mxu0
    %v1495 = vadd.f32 0.0, %v1494
    %v1496 = vpop.f32.mrf.mxu0
    %1497 = vmatprep.mubr.f32.mxu0 0.0
    %1498 = vmatmul.mubr.f32.gmra.mxu0 %v1356
    %v1499 = vpop.f32.mrf.mxu0
    %v1500 = vadd.f32 0.0, %v1499
    %v1501 = vpop.f32.mrf.mxu0
    %1502 = vdwg.mxu0
    %v1504 = vsel %vm779, %v1173, 0
    %v1507 = vsel %vm779, %v1174, 0
    %v1510 = vsel %vm779, %v1175, 0
    %v1513 = vsel %vm779, %v1176, 0
    %v1516 = vsel %vm779, %v1177, 0
    %v1519 = vsel %vm779, %v1178, 0
    %v1522 = vsel %vm779, %v1179, 0
    %v1525 = vsel %vm779, %v1180, 0
    %v1528 = vsel %vm779, %v1181, 0
    %v1531 = vsel %vm779, %v1182, 0
    %v1534 = vsel %vm779, %v1183, 0
    %v1537 = vsel %vm779, %v1184, 0
    %v1540 = vsel %vm779, %v1185, 0
    %v1543 = vsel %vm779, %v1186, 0
    %v1546 = vsel %vm779, %v1187, 0
    %v1549 = vsel %vm779, %v1188, 0
    %1551 = vmatprep.subr.mxu0 0.0
    %1552 = vmatpush1.msra.mxu0 0.0
    %1553 = vmatprep.subr.mxu0 0.0
    %1554 = vmatpush1.msra.mxu0 0.0
    %1555 = vmatprep.subr.mxu0 0.0
    %1556 = vmatpush1.msra.mxu0 0.0
    %1557 = vmatprep.subr.mxu0 0.0
    %1558 = vmatpush1.msra.mxu0 0.0
    %1559 = vmatprep.subr.mxu0 0.0
    %1560 = vmatpush1.msra.mxu0 0.0
    %1561 = vmatprep.subr.mxu0 0.0
    %1562 = vmatpush1.msra.mxu0 0.0
    %1563 = vmatprep.subr.mxu0 0.0
    %1564 = vmatpush1.msra.mxu0 0.0
    %1565 = vmatprep.subr.mxu0 0.0
    %1566 = vmatpush1.msra.mxu0 0.0
    %1567 = vmatprep.subr.mxu0 0.0
    %1568 = vmatpush1.msra.mxu0 0.0
    %1569 = vmatprep.subr.mxu0 0.0
    %1570 = vmatpush1.msra.mxu0 0.0
    %1571 = vmatprep.subr.mxu0 0.0
    %1572 = vmatpush1.msra.mxu0 0.0
    %1573 = vmatprep.subr.mxu0 0.0
    %1574 = vmatpush1.msra.mxu0 0.0
    %1575 = vmatprep.subr.mxu0 0.0
    %1576 = vmatpush1.msra.mxu0 %v1305
    %1577 = vmatprep.subr.mxu0 0.0
    %1578 = vmatpush1.msra.mxu0 %v1304
    %1579 = vmatprep.subr.mxu0 0.0
    %1580 = vmatpush1.msra.mxu0 %v1303
    %1581 = vmatprep.subr.mxu0 0.0
    %1582 = vmatpush1.msra.mxu0 %v1302
    %1583 = vmatprep.subr.mxu0 0.0
    %1584 = vmatpush2.msra.mxu0 0.0
    %1585 = vmatprep.subr.mxu0 0.0
    %1586 = vmatpush2.msra.mxu0 0.0
    %1587 = vmatprep.subr.mxu0 0.0
    %1588 = vmatpush2.msra.mxu0 0.0
    %1589 = vmatprep.subr.mxu0 0.0
    %1590 = vmatpush2.msra.mxu0 0.0
    %1591 = vmatprep.subr.mxu0 0.0
    %1592 = vmatpush2.msra.mxu0 0.0
    %1593 = vmatprep.subr.mxu0 0.0
    %1594 = vmatpush2.msra.mxu0 0.0
    %1595 = vmatprep.subr.mxu0 0.0
    %1596 = vmatpush2.msra.mxu0 0.0
    %1597 = vmatprep.subr.mxu0 0.0
    %1598 = vmatpush2.msra.mxu0 0.0
    %1599 = vmatprep.subr.mxu0 0.0
    %1600 = vmatpush2.msra.mxu0 0.0
    %1601 = vmatprep.subr.mxu0 0.0
    %1602 = vmatpush2.msra.mxu0 0.0
    %1603 = vmatprep.subr.mxu0 0.0
    %1604 = vmatpush2.msra.mxu0 0.0
    %1605 = vmatprep.subr.mxu0 0.0
    %1606 = vmatpush2.msra.mxu0 0.0
    %1607 = vmatprep.subr.mxu0 0.0
    %1608 = vmatpush2.msra.mxu0 0.0
    %1609 = vmatprep.subr.mxu0 0.0
    %1610 = vmatpush2.msra.mxu0 0.0
    %1611 = vmatprep.subr.mxu0 0.0
    %1612 = vmatpush2.msra.mxu0 0.0
    %1613 = vmatprep.subr.mxu0 0.0
    %1614 = vmatpush2.msra.mxu0 0.0
    %1615 = vmatprep.mubr.f32.mxu0 0.0
    %1616 = vmatmul.mubr.f32.gmra.mxu0 %v1504
    %v1617 = vpop.f32.mrf.mxu0
    %v1618 = vadd.f32 %v1425, %v1617
    %v1619 = vpop.f32.mrf.mxu0
    %1620 = vmatprep.mubr.f32.mxu0 0.0
    %1621 = vmatmul.mubr.f32.gmra.mxu0 %v1507
    %v1622 = vpop.f32.mrf.mxu0
    %v1623 = vadd.f32 %v1430, %v1622
    %v1624 = vpop.f32.mrf.mxu0
    %1625 = vmatprep.mubr.f32.mxu0 0.0
    %1626 = vmatmul.mubr.f32.gmra.mxu0 %v1510
    %v1627 = vpop.f32.mrf.mxu0
    %v1628 = vadd.f32 %v1435, %v1627
    %v1629 = vpop.f32.mrf.mxu0
    %1630 = vmatprep.mubr.f32.mxu0 0.0
    %1631 = vmatmul.mubr.f32.gmra.mxu0 %v1513
    %v1632 = vpop.f32.mrf.mxu0
    %v1633 = vadd.f32 %v1440, %v1632
    %v1634 = vpop.f32.mrf.mxu0
    %1635 = vmatprep.mubr.f32.mxu0 0.0
    %1636 = vmatmul.mubr.f32.gmra.mxu0 %v1516
    %v1637 = vpop.f32.mrf.mxu0
    %v1638 = vadd.f32 %v1445, %v1637
    %v1639 = vpop.f32.mrf.mxu0
    %1640 = vmatprep.mubr.f32.mxu0 0.0
    %1641 = vmatmul.mubr.f32.gmra.mxu0 %v1519
    %v1642 = vpop.f32.mrf.mxu0
    %v1643 = vadd.f32 %v1450, %v1642
    %v1644 = vpop.f32.mrf.mxu0
    %1645 = vmatprep.mubr.f32.mxu0 0.0
    %1646 = vmatmul.mubr.f32.gmra.mxu0 %v1522
    %v1647 = vpop.f32.mrf.mxu0
    %v1648 = vadd.f32 %v1455, %v1647
    %v1649 = vpop.f32.mrf.mxu0
    %1650 = vmatprep.mubr.f32.mxu0 0.0
    %1651 = vmatmul.mubr.f32.gmra.mxu0 %v1525
    %v1652 = vpop.f32.mrf.mxu0
    %v1653 = vadd.f32 %v1460, %v1652
    %v1654 = vpop.f32.mrf.mxu0
    %1655 = vmatprep.mubr.f32.mxu0 0.0
    %1656 = vmatmul.mubr.f32.gmra.mxu0 %v1528
    %v1657 = vpop.f32.mrf.mxu0
    %v1658 = vadd.f32 %v1465, %v1657
    %v1659 = vpop.f32.mrf.mxu0
    %1660 = vmatprep.mubr.f32.mxu0 0.0
    %1661 = vmatmul.mubr.f32.gmra.mxu0 %v1531
    %v1662 = vpop.f32.mrf.mxu0
    %v1663 = vadd.f32 %v1470, %v1662
    %v1664 = vpop.f32.mrf.mxu0
    %1665 = vmatprep.mubr.f32.mxu0 0.0
    %1666 = vmatmul.mubr.f32.gmra.mxu0 %v1534
    %v1667 = vpop.f32.mrf.mxu0
    %v1668 = vadd.f32 %v1475, %v1667
    %v1669 = vpop.f32.mrf.mxu0
    %1670 = vmatprep.mubr.f32.mxu0 0.0
    %1671 = vmatmul.mubr.f32.gmra.mxu0 %v1537
    %v1672 = vpop.f32.mrf.mxu0
    %v1673 = vadd.f32 %v1480, %v1672
    %v1674 = vpop.f32.mrf.mxu0
    %1675 = vmatprep.mubr.f32.mxu0 0.0
    %1676 = vmatmul.mubr.f32.gmra.mxu0 %v1540
    %v1677 = vpop.f32.mrf.mxu0
    %v1678 = vadd.f32 %v1485, %v1677
    %v1679 = vpop.f32.mrf.mxu0
    %1680 = vmatprep.mubr.f32.mxu0 0.0
    %1681 = vmatmul.mubr.f32.gmra.mxu0 %v1543
    %v1682 = vpop.f32.mrf.mxu0
    %v1683 = vadd.f32 %v1490, %v1682
    %v1684 = vpop.f32.mrf.mxu0
    %1685 = vmatprep.mubr.f32.mxu0 0.0
    %1686 = vmatmul.mubr.f32.gmra.mxu0 %v1546
    %v1687 = vpop.f32.mrf.mxu0
    %v1688 = vadd.f32 %v1495, %v1687
    %v1689 = vpop.f32.mrf.mxu0
    %1690 = vmatprep.mubr.f32.mxu0 0.0
    %1691 = vmatmul.mubr.f32.gmra.mxu0 %v1549
    %v1692 = vpop.f32.mrf.mxu0
    %v1693 = vadd.f32 %v1500, %v1692
    %v1694 = vpop.f32.mrf.mxu0
    %1695 = vdwg.mxu0
    %v1696 = vld [vmem:[%s9] sm:$0x1]
    %v1698 = vlaneseq
    %v1699 = vshrl.u32 %v1698, 7
    %v1700 = vsub.s32 0, %v1699
    %v1701 = vrot.slane %v1696, %v1700
    %v1703 = vadd.f32 %v1618, %v1701
    %v1704 = vadd.f32 %v1623, %v1701
    %v1705 = vadd.f32 %v1628, %v1701
    %v1706 = vadd.f32 %v1633, %v1701
    %v1707 = vadd.f32 %v1638, %v1701
    %v1708 = vadd.f32 %v1643, %v1701
    %v1709 = vadd.f32 %v1648, %v1701
    %v1710 = vadd.f32 %v1653, %v1701
    %v1711 = vadd.f32 %v1658, %v1701
    %v1712 = vadd.f32 %v1663, %v1701
    %v1713 = vadd.f32 %v1668, %v1701
    %v1714 = vadd.f32 %v1673, %v1701
    %v1715 = vadd.f32 %v1678, %v1701
    %v1716 = vadd.f32 %v1683, %v1701
    %v1717 = vadd.f32 %v1688, %v1701
    %v1718 = vadd.f32 %v1693, %v1701
    %1719 = vset.pattern.permute.xlu0 3
    %1720 = vperm.xlu0 %1719, %v54
    %v1721 = vpop.permute.xlu0 %1720
    %1723 = vset.pattern.permute.xlu0 3
    %1724 = vperm.xlu0 %1723, %v55
    %v1725 = vpop.permute.xlu0 %1724
    %1727 = vset.pattern.permute.xlu0 3
    %1728 = vperm.xlu0 %1727, %v56
    %v1729 = vpop.permute.xlu0 %1728
    %1731 = vset.pattern.permute.xlu0 3
    %1732 = vperm.xlu0 %1731, %v57
    %v1733 = vpop.permute.xlu0 %1732
    %1735 = vset.pattern.permute.xlu0 3
    %1736 = vperm.xlu0 %1735, %v58
    %v1737 = vpop.permute.xlu0 %1736
    %1739 = vset.pattern.permute.xlu0 3
    %1740 = vperm.xlu0 %1739, %v59
    %v1741 = vpop.permute.xlu0 %1740
    %1743 = vset.pattern.permute.xlu0 3
    %1744 = vperm.xlu0 %1743, %v60
    %v1745 = vpop.permute.xlu0 %1744
    %1747 = vset.pattern.permute.xlu0 3
    %1748 = vperm.xlu0 %1747, %v61
    %v1749 = vpop.permute.xlu0 %1748
    %1751 = vset.pattern.permute.xlu0 3
    %1752 = vperm.xlu0 %1751, %v62
    %v1753 = vpop.permute.xlu0 %1752
    %1755 = vset.pattern.permute.xlu0 3
    %1756 = vperm.xlu0 %1755, %v63
    %v1757 = vpop.permute.xlu0 %1756
    %1759 = vset.pattern.permute.xlu0 3
    %1760 = vperm.xlu0 %1759, %v64
    %v1761 = vpop.permute.xlu0 %1760
    %1763 = vset.pattern.permute.xlu0 3
    %1764 = vperm.xlu0 %1763, %v65
    %v1765 = vpop.permute.xlu0 %1764
    %1767 = vset.pattern.permute.xlu0 3
    %1768 = vperm.xlu0 %1767, %v66
    %v1769 = vpop.permute.xlu0 %1768
    %1771 = vset.pattern.permute.xlu0 3
    %1772 = vperm.xlu0 %1771, %v67
    %v1773 = vpop.permute.xlu0 %1772
    %1775 = vset.pattern.permute.xlu0 3
    %1776 = vperm.xlu0 %1775, %v68
    %v1777 = vpop.permute.xlu0 %1776
    %1779 = vset.pattern.permute.xlu0 3
    %1780 = vperm.xlu0 %1779, %v69
    %v1781 = vpop.permute.xlu0 %1780
    %v1783 = vmul.f32 %v1718, %v1721
    %v1784 = vmul.f32 %v1703, %v1725
    %v1785 = vmul.f32 %v1704, %v1729
    %v1786 = vmul.f32 %v1705, %v1733
    %v1787 = vmul.f32 %v1706, %v1737
    %v1788 = vmul.f32 %v1707, %v1741
    %v1789 = vmul.f32 %v1708, %v1745
    %v1790 = vmul.f32 %v1709, %v1749
    %v1791 = vmul.f32 %v1710, %v1753
    %v1792 = vmul.f32 %v1711, %v1757
    %v1793 = vmul.f32 %v1712, %v1761
    %v1794 = vmul.f32 %v1713, %v1765
    %v1795 = vmul.f32 %v1714, %v1769
    %v1796 = vmul.f32 %v1715, %v1773
    %v1797 = vmul.f32 %v1716, %v1777
    %v1798 = vmul.f32 %v1717, %v1781
    %v1799 = vld [vmem:[%s10] sm:$0x1]
    %v1801 = vlaneseq
    %v1802 = vshrl.u32 %v1801, 7
    %v1803 = vsub.s32 0, %v1802
    %v1804 = vrot.slane %v1799, %v1803
    %v1806 = vmul.f32 %v1703, %v1804
    %v1807 = vmul.f32 %v1704, %v1804
    %v1808 = vmul.f32 %v1705, %v1804
    %v1809 = vmul.f32 %v1706, %v1804
    %v1810 = vmul.f32 %v1707, %v1804
    %v1811 = vmul.f32 %v1708, %v1804
    %v1812 = vmul.f32 %v1709, %v1804
    %v1813 = vmul.f32 %v1710, %v1804
    %v1814 = vmul.f32 %v1711, %v1804
    %v1815 = vmul.f32 %v1712, %v1804
    %v1816 = vmul.f32 %v1713, %v1804
    %v1817 = vmul.f32 %v1714, %v1804
    %v1818 = vmul.f32 %v1715, %v1804
    %v1819 = vmul.f32 %v1716, %v1804
    %v1820 = vmul.f32 %v1717, %v1804
    %v1821 = vmul.f32 %v1718, %v1804
    %v1822 = vld [vmem:[%s11] sm:$0x1]
    %v1824 = vlaneseq
    %v1825 = vshrl.u32 %v1824, 7
    %v1826 = vsub.s32 0, %v1825
    %v1827 = vrot.slane %v1822, %v1826
    %v1829 = vmul.f32 %v1783, %v1827
    %v1830 = vmul.f32 %v1784, %v1827
    %v1831 = vmul.f32 %v1785, %v1827
    %v1832 = vmul.f32 %v1786, %v1827
    %v1833 = vmul.f32 %v1787, %v1827
    %v1834 = vmul.f32 %v1788, %v1827
    %v1835 = vmul.f32 %v1789, %v1827
    %v1836 = vmul.f32 %v1790, %v1827
    %v1837 = vmul.f32 %v1791, %v1827
    %v1838 = vmul.f32 %v1792, %v1827
    %v1839 = vmul.f32 %v1793, %v1827
    %v1840 = vmul.f32 %v1794, %v1827
    %v1841 = vmul.f32 %v1795, %v1827
    %v1842 = vmul.f32 %v1796, %v1827
    %v1843 = vmul.f32 %v1797, %v1827
    %v1844 = vmul.f32 %v1798, %v1827
    %v1845 = vadd.f32 %v1806, %v1829
    %v1846 = vadd.f32 %v1807, %v1830
    %v1847 = vadd.f32 %v1808, %v1831
    %v1848 = vadd.f32 %v1809, %v1832
    %v1849 = vadd.f32 %v1810, %v1833
    %v1850 = vadd.f32 %v1811, %v1834
    %v1851 = vadd.f32 %v1812, %v1835
    %v1852 = vadd.f32 %v1813, %v1836
    %v1853 = vadd.f32 %v1814, %v1837
    %v1854 = vadd.f32 %v1815, %v1838
    %v1855 = vadd.f32 %v1816, %v1839
    %v1856 = vadd.f32 %v1817, %v1840
    %v1857 = vadd.f32 %v1818, %v1841
    %v1858 = vadd.f32 %v1819, %v1842
    %v1859 = vadd.f32 %v1820, %v1843
    %v1860 = vadd.f32 %v1821, %v1844
    %v1861 = vsel %vm779, %v1845, 0.0
    %1862 = vadd.xlane.f32.xlu0 %v1861
    %v1863 = vpop.xlane.xlu0 %1862
    %v1864 = vsel %vm779, %v1846, 0.0
    %1865 = vadd.xlane.f32.xlu0 %v1864
    %v1866 = vpop.xlane.xlu0 %1865
    %v1867 = vsel %vm779, %v1847, 0.0
    %1868 = vadd.xlane.f32.xlu0 %v1867
    %v1869 = vpop.xlane.xlu0 %1868
    %v1870 = vsel %vm779, %v1848, 0.0
    %1871 = vadd.xlane.f32.xlu0 %v1870
    %v1872 = vpop.xlane.xlu0 %1871
    %v1873 = vsel %vm779, %v1849, 0.0
    %1874 = vadd.xlane.f32.xlu0 %v1873
    %v1875 = vpop.xlane.xlu0 %1874
    %v1876 = vsel %vm779, %v1850, 0.0
    %1877 = vadd.xlane.f32.xlu0 %v1876
    %v1878 = vpop.xlane.xlu0 %1877
    %v1879 = vsel %vm779, %v1851, 0.0
    %1880 = vadd.xlane.f32.xlu0 %v1879
    %v1881 = vpop.xlane.xlu0 %1880
    %v1882 = vsel %vm779, %v1852, 0.0
    %1883 = vadd.xlane.f32.xlu0 %v1882
    %v1884 = vpop.xlane.xlu0 %1883
    %v1885 = vsel %vm779, %v1853, 0.0
    %1886 = vadd.xlane.f32.xlu0 %v1885
    %v1887 = vpop.xlane.xlu0 %1886
    %v1888 = vsel %vm779, %v1854, 0.0
    %1889 = vadd.xlane.f32.xlu0 %v1888
    %v1890 = vpop.xlane.xlu0 %1889
    %v1891 = vsel %vm779, %v1855, 0.0
    %1892 = vadd.xlane.f32.xlu0 %v1891
    %v1893 = vpop.xlane.xlu0 %1892
    %v1894 = vsel %vm779, %v1856, 0.0
    %1895 = vadd.xlane.f32.xlu0 %v1894
    %v1896 = vpop.xlane.xlu0 %1895
    %v1897 = vsel %vm779, %v1857, 0.0
    %1898 = vadd.xlane.f32.xlu0 %v1897
    %v1899 = vpop.xlane.xlu0 %1898
    %v1900 = vsel %vm779, %v1858, 0.0
    %1901 = vadd.xlane.f32.xlu0 %v1900
    %v1902 = vpop.xlane.xlu0 %1901
    %v1903 = vsel %vm779, %v1859, 0.0
    %1904 = vadd.xlane.f32.xlu0 %v1903
    %v1905 = vpop.xlane.xlu0 %1904
    %v1906 = vsel %vm779, %v1860, 0.0
    %1907 = vadd.xlane.f32.xlu0 %v1906
    %v1908 = vpop.xlane.xlu0 %1907
    %v1909 = vld [vmem:[%s13] sm:$0xff]
    %v1910 = vld [vmem:[%s13 + $0x8] sm:$0xff]
    %v1911 = vld [vmem:[%s13 + $0x10] sm:$0xff]
    %v1912 = vld [vmem:[%s13 + $0x18] sm:$0xff]
    %v1913 = vld [vmem:[%s13 + $0x20] sm:$0xff]
    %v1914 = vld [vmem:[%s13 + $0x28] sm:$0xff]
    %v1915 = vld [vmem:[%s13 + $0x30] sm:$0xff]
    %v1916 = vld [vmem:[%s13 + $0x38] sm:$0xff]
    %v1917 = vld [vmem:[%s13 + $0x40] sm:$0xff]
    %v1918 = vld [vmem:[%s13 + $0x48] sm:$0xff]
    %v1919 = vld [vmem:[%s13 + $0x50] sm:$0xff]
    %v1920 = vld [vmem:[%s13 + $0x58] sm:$0xff]
    %v1921 = vld [vmem:[%s13 + $0x60] sm:$0xff]
    %v1922 = vld [vmem:[%s13 + $0x68] sm:$0xff]
    %v1923 = vld [vmem:[%s13 + $0x70] sm:$0xff]
    %v1924 = vld [vmem:[%s13 + $0x78] sm:$0xff]
    %v1925 = vmul.f32 %v1863, %v1909
    %v1926 = vmul.f32 %v1866, %v1910
    %v1927 = vmul.f32 %v1869, %v1911
    %v1928 = vmul.f32 %v1872, %v1912
    %v1929 = vmul.f32 %v1875, %v1913
    %v1930 = vmul.f32 %v1878, %v1914
    %v1931 = vmul.f32 %v1881, %v1915
    %v1932 = vmul.f32 %v1884, %v1916
    %v1933 = vmul.f32 %v1887, %v1917
    %v1934 = vmul.f32 %v1890, %v1918
    %v1935 = vmul.f32 %v1893, %v1919
    %v1936 = vmul.f32 %v1896, %v1920
    %v1937 = vmul.f32 %v1899, %v1921
    %v1938 = vmul.f32 %v1902, %v1922
    %v1939 = vmul.f32 %v1905, %v1923
    %v1940 = vmul.f32 %v1908, %v1924
    %v1941 = vld [vmem:[%s14] sm:$0x3]
    %v1942 = vld [vmem:[%s15] sm:$0x1]
    %v1944 = vlaneseq
    %v1945 = vshrl.u32 %v1944, 7
    %v1946 = vsub.s32 0, %v1945
    %v1947 = vrot.slane %v1942, %v1946
    %1949 = vmatprep.subr.mxu0 0.0
    %1950 = vmatpush1.msra.mxu0 %v1940
    %1951 = vmatprep.subr.mxu0 0.0
    %1952 = vmatpush1.msra.mxu0 %v1939
    %1953 = vmatprep.subr.mxu0 0.0
    %1954 = vmatpush1.msra.mxu0 %v1938
    %1955 = vmatprep.subr.mxu0 0.0
    %1956 = vmatpush1.msra.mxu0 %v1937
    %1957 = vmatprep.subr.mxu0 0.0
    %1958 = vmatpush1.msra.mxu0 %v1936
    %1959 = vmatprep.subr.mxu0 0.0
    %1960 = vmatpush1.msra.mxu0 %v1935
    %1961 = vmatprep.subr.mxu0 0.0
    %1962 = vmatpush1.msra.mxu0 %v1934
    %1963 = vmatprep.subr.mxu0 0.0
    %1964 = vmatpush1.msra.mxu0 %v1933
    %1965 = vmatprep.subr.mxu0 0.0
    %1966 = vmatpush1.msra.mxu0 %v1932
    %1967 = vmatprep.subr.mxu0 0.0
    %1968 = vmatpush1.msra.mxu0 %v1931
    %1969 = vmatprep.subr.mxu0 0.0
    %1970 = vmatpush1.msra.mxu0 %v1930
    %1971 = vmatprep.subr.mxu0 0.0
    %1972 = vmatpush1.msra.mxu0 %v1929
    %1973 = vmatprep.subr.mxu0 0.0
    %1974 = vmatpush1.msra.mxu0 %v1928
    %1975 = vmatprep.subr.mxu0 0.0
    %1976 = vmatpush1.msra.mxu0 %v1927
    %1977 = vmatprep.subr.mxu0 0.0
    %1978 = vmatpush1.msra.mxu0 %v1926
    %1979 = vmatprep.subr.mxu0 0.0
    %1980 = vmatpush1.msra.mxu0 %v1925
    %1981 = vmatprep.subr.mxu0 0.0
    %1982 = vmatpush2.msra.mxu0 0.0
    %1983 = vmatprep.subr.mxu0 0.0
    %1984 = vmatpush2.msra.mxu0 0.0
    %1985 = vmatprep.subr.mxu0 0.0
    %1986 = vmatpush2.msra.mxu0 0.0
    %1987 = vmatprep.subr.mxu0 0.0
    %1988 = vmatpush2.msra.mxu0 0.0
    %1989 = vmatprep.subr.mxu0 0.0
    %1990 = vmatpush2.msra.mxu0 0.0
    %1991 = vmatprep.subr.mxu0 0.0
    %1992 = vmatpush2.msra.mxu0 0.0
    %1993 = vmatprep.subr.mxu0 0.0
    %1994 = vmatpush2.msra.mxu0 0.0
    %1995 = vmatprep.subr.mxu0 0.0
    %1996 = vmatpush2.msra.mxu0 0.0
    %1997 = vmatprep.subr.mxu0 0.0
    %1998 = vmatpush2.msra.mxu0 0.0
    %1999 = vmatprep.subr.mxu0 0.0
    %2000 = vmatpush2.msra.mxu0 0.0
    %2001 = vmatprep.subr.mxu0 0.0
    %2002 = vmatpush2.msra.mxu0 0.0
    %2003 = vmatprep.subr.mxu0 0.0
    %2004 = vmatpush2.msra.mxu0 0.0
    %2005 = vmatprep.subr.mxu0 0.0
    %2006 = vmatpush2.msra.mxu0 0.0
    %2007 = vmatprep.subr.mxu0 0.0
    %2008 = vmatpush2.msra.mxu0 0.0
    %2009 = vmatprep.subr.mxu0 0.0
    %2010 = vmatpush2.msra.mxu0 0.0
    %2011 = vmatprep.subr.mxu0 0.0
    %2012 = vmatpush2.msra.mxu0 0.0
    %2013 = vmatprep.mubr.f32.mxu0 0.0
    %2014 = vmatmul.mubr.f32.gmra.mxu0 %v1941
    %v2015 = vpop.f32.mrf.mxu0
    %v2016 = vadd.f32 %v1947, %v2015
    %v2017 = vpop.f32.mrf.mxu0
    %2018 = vdwg.mxu0
    %vm2019 = vcmask 123904
    %2020 = vst.msk [vmem:[#allocation2] sm:$0x3] %vm2019, %v2016
    // Predicated region
    $region66: #{conv_encoder_forward.1} parent=1 // pred_check
      _
    $region67: #{conv_encoder_forward.1} parent=1 // pred_check_branch
      %2022 = sbr.rel (0) target = $region69
    $region68: #{conv_encoder_forward.1} parent=1 // pred_region
      %s2024 = ssub.s32 32, 32
      %2025 = vsyncadd [#allocation3], %s2024
      %s2027 = sshll.u32 [#allocation2], 4
      %s2028 = int_to_ptr.vmem [resolvable:$true] %s2027
      %2030 = dma.vmem_to_hbm [thread:$0]  %s2028, 32, %s16, [#allocation3]
    $region69: #{conv_encoder_forward.1} parent=1 // pred_fallthru
      _
    // Predicated region
    $region70: #{conv_encoder_forward.1} parent=1 // pred_check
      _
    $region71: #{conv_encoder_forward.1} parent=1 // pred_check_branch
      %2032 = sbr.rel (0) target = $region73
    $region72: #{conv_encoder_forward.1} parent=1 // pred_region
      %2033 = dma.done [#allocation3], 32
    $region73: #{conv_encoder_forward.1} parent=1 // pred_fallthru
      _
    %2034 = vsyncpa [#allocation3], 1

</llo_original>
